<compile_context>
chip_gen: v7x
topology: tpu7x:2x2x1
jax: 0.10.0
libtpu: 0.0.40
codegen_flags: <defaults>
</compile_context>

<pallas_src>
import functools

import jax
import jax.numpy as jnp
from jax.experimental import pallas as pl
from jax.experimental.pallas import tpu as pltpu


# ----------------------------- Pallas kernel --------------------------------
def _gru_fc_kernel(num_layers, seq_len, hidden_dim, x_ref, *refs):
    """refs = [w_ih_T, w_hh_T, b_ih, b_hh] * num_layers + [fc_w_T, fc_b, out_ref, seq_scratch].

    x_ref:       (T*B, D)  time-major flattened input (row = t*B + b)
    seq_scratch: (T*B, H)  VMEM scratch holding an intermediate layer's output sequence
    out_ref:     (B, latent_dim)
    """
    layer_refs = refs[: 4 * num_layers]
    fc_w_ref = refs[4 * num_layers]
    fc_b_ref = refs[4 * num_layers + 1]
    out_ref = refs[4 * num_layers + 2]
    seq_ref = refs[4 * num_layers + 3]

    T = seq_len
    H = hidden_dim
    TB = x_ref.shape[0]
    B = TB // T

    layer_in = x_ref[...]  # (T*B, Din) for layer 0

    h = None
    for l in range(num_layers):  # static unroll over layers
        w_ih = layer_refs[4 * l + 0][...]   # (Din, 3H)
        w_hh = layer_refs[4 * l + 1][...]   # (H, 3H)
        b_ih = layer_refs[4 * l + 2][...]   # (1, 3H)
        b_hh = layer_refs[4 * l + 3][...]   # (1, 3H)

        # Hoisted input projection: ONE matmul over all timesteps, b_ih folded in.
        gi_all = (
            jnp.dot(layer_in, w_ih, preferred_element_type=jnp.float32) + b_ih
        )  # (T*B, 3H)

        # Hoist the recurrent-bias broadcast out of the time loop (no per-step
        # broadcast_in_dim inside the hot loop).
        b_hh_b = jnp.broadcast_to(b_hh, (B, 3 * H))

        is_last = l == num_layers - 1
        h = jnp.zeros((B, H), dtype=jnp.float32)

        # Fully-unrolled time loop (T is static & small): only gh = h @ W_hh is on
        # the serial dependence chain.
        for t in range(T):
            gi = gi_all[t * B:(t + 1) * B, :]                                  # (B, 3H)
            gh = jnp.dot(h, w_hh, preferred_element_type=jnp.float32) + b_hh_b  # (B, 3H)
            # PyTorch gate ordering: [reset, update, new].
            # (H=32 gate slices are lane-unaligned; acceptable at this size — pad the
            #  gate layout to 128-lane boundaries only if H grows.)
            r = jax.nn.sigmoid(gi[:, 0:H] + gh[:, 0:H])
            z = jax.nn.sigmoid(gi[:, H:2 * H] + gh[:, H:2 * H])
            n = jnp.tanh(gi[:, 2 * H:3 * H] + r * gh[:, 2 * H:3 * H])
            h = (1.0 - z) * n + z * h
            if not is_last:
                seq_ref[t * B:(t + 1) * B, :] = h   # store this layer's output sequence

        if not is_last:
            layer_in = seq_ref[...]  # (T*B, H) feeds the next layer's hoisted matmul

    # out[:, -1] of the top GRU layer == final hidden state of the last layer.
    last = jnp.maximum(h, 0.0)  # relu
    out_ref[...] = (
        jnp.dot(last, fc_w_ref[...], preferred_element_type=jnp.float32)
        + fc_b_ref[...]
    )


# ------------------------------- Wrapper -------------------------------------
def latent_generator_forward(x, params):
    """x: (B, T, representation_dim) float32 (batch_first, like PyTorch)."""
    B, T, D = x.shape
    # Time-major flatten outside the kernel (free XLA transpose): row = t*B + b.
    x2d = jnp.transpose(x, (1, 0, 2)).reshape(T * B, D)

    layers = params["layers"]
    num_layers = len(layers)
    H = layers[0]["w_hh_T"].shape[0]
    latent_dim = params["fc_w_T"].shape[1]

    inputs = [x2d]
    for lp in layers:
        inputs += [lp["w_ih_T"], lp["w_hh_T"], lp["b_ih"], lp["b_hh"]]
    inputs += [params["fc_w_T"], params["fc_b"]]

    kernel = functools.partial(_gru_fc_kernel, num_layers, T, H)

    # Advisory cost estimate so XLA schedules surrounding ops around this
    # long-latency sequential kernel.
    flops = 0
    d_in = D
    for _ in range(num_layers):
        flops += 2 * T * B * d_in * 3 * H   # hoisted input projection (one matmul)
        flops += 2 * T * B * H * 3 * H      # recurrent projection (T serial matmuls)
        d_in = H
    flops += 2 * B * H * latent_dim         # final FC
    transcendentals = 3 * T * B * H * num_layers  # 2 sigmoids + 1 tanh per gate group
    bytes_accessed = 4 * (int(x2d.size)
                          + sum(int(a.size) for a in inputs[1:])
                          + B * latent_dim)

    in_specs = [pl.BlockSpec(memory_space=pltpu.MemorySpace.VMEM) for _ in inputs]
    out_spec = pl.BlockSpec(memory_space=pltpu.MemorySpace.VMEM)

    return pl.pallas_call(
        kernel,
        out_shape=jax.ShapeDtypeStruct((B, latent_dim), jnp.float32),
        in_specs=in_specs,
        out_specs=out_spec,
        scratch_shapes=[pltpu.VMEM((T * B, H), jnp.float32)],
        cost_estimate=pl.CostEstimate(
            flops=flops,
            transcendentals=transcendentals,
            bytes_accessed=bytes_accessed,
        ),
    )(*inputs)


# ------------------------ Deterministic parameter init -----------------------
def init_params(key, representation_dim, hidden_dim, num_layers, latent_dim):
    """Mimics PyTorch default init (uniform(-k, k)) with deterministic JAX keys."""
    params = {"layers": []}
    k_gru = 1.0 / jnp.sqrt(hidden_dim)
    for l in range(num_layers):
        in_dim = representation_dim if l == 0 else hidden_dim
        key, k1, k2, k3, k4 = jax.random.split(key, 5)
        w_ih = jax.random.uniform(k1, (3 * hidden_dim, in_dim), jnp.float32, -k_gru, k_gru)
        w_hh = jax.random.uniform(k2, (3 * hidden_dim, hidden_dim), jnp.float32, -k_gru, k_gru)
        b_ih = jax.random.uniform(k3, (3 * hidden_dim,), jnp.float32, -k_gru, k_gru)
        b_hh = jax.random.uniform(k4, (3 * hidden_dim,), jnp.float32, -k_gru, k_gru)
        params["layers"].append({
            "w_ih_T": w_ih.T,                      # (in_dim, 3H)
            "w_hh_T": w_hh.T,                      # (H, 3H)
            "b_ih": b_ih.reshape(1, -1),           # (1, 3H)
            "b_hh": b_hh.reshape(1, -1),           # (1, 3H)
        })
    k_fc = 1.0 / jnp.sqrt(hidden_dim)
    key, k5, k6 = jax.random.split(key, 3)
    fc_w = jax.random.uniform(k5, (latent_dim, hidden_dim), jnp.float32, -k_fc, k_fc)
    fc_b = jax.random.uniform(k6, (latent_dim,), jnp.float32, -k_fc, k_fc)
    params["fc_w_T"] = fc_w.T                      # (H, latent_dim)
    params["fc_b"] = fc_b.reshape(1, -1)           # (1, latent_dim)
    return params


# --------------------------- Pure-JAX reference -------------------------------
def reference_forward(x, params):
    B, T, D = x.shape
    layers = params["layers"]
    H = layers[0]["w_hh_T"].shape[0]
    seq = x  # (B, T, D)
    for lp in layers:
        h = jnp.zeros((B, H), jnp.float32)
        outs = []
        for t in range(T):
            inp = seq[:, t, :]
            gi = inp @ lp["w_ih_T"] + lp["b_ih"]
            gh = h @ lp["w_hh_T"] + lp["b_hh"]
            r = jax.nn.sigmoid(gi[:, 0:H] + gh[:, 0:H])
            z = jax.nn.sigmoid(gi[:, H:2 * H] + gh[:, H:2 * H])
            n = jnp.tanh(gi[:, 2 * H:3 * H] + r * gh[:, 2 * H:3 * H])
            h = (1.0 - z) * n + z * h
            outs.append(h)
        seq = jnp.stack(outs, axis=1)  # (B, T, H)
    last = jnp.maximum(seq[:, -1], 0.0)
    return last @ params["fc_w_T"] + params["fc_b"]


# ----------------------------------- Main -------------------------------------
if __name__ == "__main__":
    # Small shapes consistent with the module's forward:
    #   x: (batch=2, seq=8, representation_dim=8)
    #   hidden_dim=32, num_layers=2, latent_dim=16
    B, T, REP_DIM = 2, 8, 8
    HIDDEN_DIM, NUM_LAYERS, LATENT_DIM = 32, 2, 16

    root = jax.random.PRNGKey(0)
    kx, kp = jax.random.split(root)
    x = jax.random.normal(kx, (B, T, REP_DIM), dtype=jnp.float32)
    params = init_params(kp, REP_DIM, HIDDEN_DIM, NUM_LAYERS, LATENT_DIM)

    latent = latent_generator_forward(x, params)
    latent = jax.block_until_ready(latent)

    ref = reference_forward(x, params)
    assert latent.shape == (B, LATENT_DIM)
    assert jnp.allclose(latent, ref, atol=1e-5, rtol=1e-5), (
        f"max abs err = {jnp.max(jnp.abs(latent - ref))}"
    )
    print("KERNEL_OK")
</pallas_src>

<mosaic_0001>
module attributes {stable_mosaic.version = 11 : i64} {
  func.func @_gru_fc_kernel(%arg0: memref<16x8xf32, #tpu.memory_space<vmem>>, %arg1: memref<8x96xf32, #tpu.memory_space<vmem>>, %arg2: memref<32x96xf32, #tpu.memory_space<vmem>>, %arg3: memref<1x96xf32, #tpu.memory_space<vmem>>, %arg4: memref<1x96xf32, #tpu.memory_space<vmem>>, %arg5: memref<32x96xf32, #tpu.memory_space<vmem>>, %arg6: memref<32x96xf32, #tpu.memory_space<vmem>>, %arg7: memref<1x96xf32, #tpu.memory_space<vmem>>, %arg8: memref<1x96xf32, #tpu.memory_space<vmem>>, %arg9: memref<32x16xf32, #tpu.memory_space<vmem>>, %arg10: memref<1x16xf32, #tpu.memory_space<vmem>>, %arg11: memref<2x16xf32, #tpu.memory_space<vmem>>, %arg12: memref<16x32xf32, #tpu.memory_space<vmem>>) attributes {dimension_semantics = [], scalar_prefetch = 0 : i64, scratch_operands = 1 : i64, tpu.core_type = #tpu.core_type<tc>} {
    %c0 = arith.constant 0 : index
    %c0_0 = arith.constant 0 : index
    %0 = vector.load %arg0[%c0, %c0_0] : memref<16x8xf32, #tpu.memory_space<vmem>>, vector<16x8xf32>
    %c0_1 = arith.constant 0 : index
    %c0_2 = arith.constant 0 : index
    %1 = vector.load %arg1[%c0_1, %c0_2] : memref<8x96xf32, #tpu.memory_space<vmem>>, vector<8x96xf32>
    %c0_3 = arith.constant 0 : index
    %c0_4 = arith.constant 0 : index
    %2 = vector.load %arg2[%c0_3, %c0_4] : memref<32x96xf32, #tpu.memory_space<vmem>>, vector<32x96xf32>
    %c0_5 = arith.constant 0 : index
    %c0_6 = arith.constant 0 : index
    %3 = vector.load %arg3[%c0_5, %c0_6] : memref<1x96xf32, #tpu.memory_space<vmem>>, vector<1x96xf32>
    %c0_7 = arith.constant 0 : index
    %c0_8 = arith.constant 0 : index
    %4 = vector.load %arg4[%c0_7, %c0_8] : memref<1x96xf32, #tpu.memory_space<vmem>>, vector<1x96xf32>
    %cst = arith.constant dense<0.000000e+00> : vector<16x96xf32>
    %5 = tpu.matmul %0, %1, %cst {dimension_numbers = #tpu.dot_dimension_numbers<[1], [0], [0], [1], [0, 0, 1, 1], [], []>} : vector<16x8xf32>, vector<8x96xf32>, vector<16x96xf32> -> vector<16x96xf32>
    %6 = vector.broadcast %3 : vector<1x96xf32> to vector<16x96xf32>
    %7 = arith.addf %5, %6 : vector<16x96xf32>
    %8 = vector.shape_cast %4 : vector<1x96xf32> to vector<1x96xf32>
    %9 = vector.broadcast %8 : vector<1x96xf32> to vector<2x96xf32>
    %cst_9 = arith.constant 0.000000e+00 : f32
    %10 = vector.broadcast %cst_9 : f32 to vector<2x32xf32>
    %11 = vector.extract_strided_slice %7 {offsets = [0, 0], sizes = [2, 96], strides = [1, 1]} : vector<16x96xf32> to vector<2x96xf32>
    %cst_10 = arith.constant dense<0.000000e+00> : vector<2x96xf32>
    %12 = tpu.matmul %10, %2, %cst_10 {dimension_numbers = #tpu.dot_dimension_numbers<[1], [0], [0], [1], [0, 0, 1, 1], [], []>} : vector<2x32xf32>, vector<32x96xf32>, vector<2x96xf32> -> vector<2x96xf32>
    %13 = arith.addf %12, %9 : vector<2x96xf32>
    %14 = vector.extract_strided_slice %11 {offsets = [0, 0], sizes = [2, 32], strides = [1, 1]} : vector<2x96xf32> to vector<2x32xf32>
    %15 = vector.extract_strided_slice %13 {offsets = [0, 0], sizes = [2, 32], strides = [1, 1]} : vector<2x96xf32> to vector<2x32xf32>
    %16 = arith.addf %14, %15 : vector<2x32xf32>
    %17 = arith.negf %16 : vector<2x32xf32>
    %18 = math.exp %17 : vector<2x32xf32>
    %cst_11 = arith.constant 1.000000e+00 : f32
    %19 = vector.broadcast %cst_11 : f32 to vector<2x32xf32>
    %20 = arith.addf %19, %18 : vector<2x32xf32>
    %21 = arith.divf %19, %20 : vector<2x32xf32>
    %22 = vector.extract_strided_slice %11 {offsets = [0, 32], sizes = [2, 32], strides = [1, 1]} : vector<2x96xf32> to vector<2x32xf32>
    %23 = vector.extract_strided_slice %13 {offsets = [0, 32], sizes = [2, 32], strides = [1, 1]} : vector<2x96xf32> to vector<2x32xf32>
    %24 = arith.addf %22, %23 : vector<2x32xf32>
    %25 = arith.negf %24 : vector<2x32xf32>
    %26 = math.exp %25 : vector<2x32xf32>
    %cst_12 = arith.constant 1.000000e+00 : f32
    %27 = vector.broadcast %cst_12 : f32 to vector<2x32xf32>
    %28 = arith.addf %27, %26 : vector<2x32xf32>
    %29 = arith.divf %27, %28 : vector<2x32xf32>
    %30 = vector.extract_strided_slice %11 {offsets = [0, 64], sizes = [2, 32], strides = [1, 1]} : vector<2x96xf32> to vector<2x32xf32>
    %31 = vector.extract_strided_slice %13 {offsets = [0, 64], sizes = [2, 32], strides = [1, 1]} : vector<2x96xf32> to vector<2x32xf32>
    %32 = arith.mulf %21, %31 : vector<2x32xf32>
    %33 = arith.addf %30, %32 : vector<2x32xf32>
    %34 = math.tanh %33 : vector<2x32xf32>
    %cst_13 = arith.constant 1.000000e+00 : f32
    %35 = vector.broadcast %cst_13 : f32 to vector<2x32xf32>
    %36 = arith.subf %35, %29 : vector<2x32xf32>
    %37 = arith.mulf %36, %34 : vector<2x32xf32>
    %38 = arith.mulf %29, %10 : vector<2x32xf32>
    %39 = arith.addf %37, %38 : vector<2x32xf32>
    %c0_14 = arith.constant 0 : index
    %c0_15 = arith.constant 0 : index
    %40 = vector.load %arg12[%c0_14, %c0_15] : memref<16x32xf32, #tpu.memory_space<vmem>>, vector<2x32xf32>
    tpu.vector_store %arg12[%c0_14, %c0_15], %39 {strides = array<i32>} : memref<16x32xf32, #tpu.memory_space<vmem>>, vector<2x32xf32>,
    %41 = vector.extract_strided_slice %7 {offsets = [2, 0], sizes = [2, 96], strides = [1, 1]} : vector<16x96xf32> to vector<2x96xf32>
    %cst_16 = arith.constant dense<0.000000e+00> : vector<2x96xf32>
    %42 = tpu.matmul %39, %2, %cst_16 {dimension_numbers = #tpu.dot_dimension_numbers<[1], [0], [0], [1], [0, 0, 1, 1], [], []>} : vector<2x32xf32>, vector<32x96xf32>, vector<2x96xf32> -> vector<2x96xf32>
    %43 = arith.addf %42, %9 : vector<2x96xf32>
    %44 = vector.extract_strided_slice %41 {offsets = [0, 0], sizes = [2, 32], strides = [1, 1]} : vector<2x96xf32> to vector<2x32xf32>
    %45 = vector.extract_strided_slice %43 {offsets = [0, 0], sizes = [2, 32], strides = [1, 1]} : vector<2x96xf32> to vector<2x32xf32>
    %46 = arith.addf %44, %45 : vector<2x32xf32>
    %47 = arith.negf %46 : vector<2x32xf32>
    %48 = math.exp %47 : vector<2x32xf32>
    %cst_17 = arith.constant 1.000000e+00 : f32
    %49 = vector.broadcast %cst_17 : f32 to vector<2x32xf32>
    %50 = arith.addf %49, %48 : vector<2x32xf32>
    %51 = arith.divf %49, %50 : vector<2x32xf32>
    %52 = vector.extract_strided_slice %41 {offsets = [0, 32], sizes = [2, 32], strides = [1, 1]} : vector<2x96xf32> to vector<2x32xf32>
    %53 = vector.extract_strided_slice %43 {offsets = [0, 32], sizes = [2, 32], strides = [1, 1]} : vector<2x96xf32> to vector<2x32xf32>
    %54 = arith.addf %52, %53 : vector<2x32xf32>
    %55 = arith.negf %54 : vector<2x32xf32>
    %56 = math.exp %55 : vector<2x32xf32>
    %cst_18 = arith.constant 1.000000e+00 : f32
    %57 = vector.broadcast %cst_18 : f32 to vector<2x32xf32>
    %58 = arith.addf %57, %56 : vector<2x32xf32>
    %59 = arith.divf %57, %58 : vector<2x32xf32>
    %60 = vector.extract_strided_slice %41 {offsets = [0, 64], sizes = [2, 32], strides = [1, 1]} : vector<2x96xf32> to vector<2x32xf32>
    %61 = vector.extract_strided_slice %43 {offsets = [0, 64], sizes = [2, 32], strides = [1, 1]} : vector<2x96xf32> to vector<2x32xf32>
    %62 = arith.mulf %51, %61 : vector<2x32xf32>
    %63 = arith.addf %60, %62 : vector<2x32xf32>
    %64 = math.tanh %63 : vector<2x32xf32>
    %cst_19 = arith.constant 1.000000e+00 : f32
    %65 = vector.broadcast %cst_19 : f32 to vector<2x32xf32>
    %66 = arith.subf %65, %59 : vector<2x32xf32>
    %67 = arith.mulf %66, %64 : vector<2x32xf32>
    %68 = arith.mulf %59, %39 : vector<2x32xf32>
    %69 = arith.addf %67, %68 : vector<2x32xf32>
    %c2 = arith.constant 2 : index
    %c0_20 = arith.constant 0 : index
    %70 = vector.load %arg12[%c2, %c0_20] : memref<16x32xf32, #tpu.memory_space<vmem>>, vector<2x32xf32>
    tpu.vector_store %arg12[%c2, %c0_20], %69 {strides = array<i32>} : memref<16x32xf32, #tpu.memory_space<vmem>>, vector<2x32xf32>,
    %71 = vector.extract_strided_slice %7 {offsets = [4, 0], sizes = [2, 96], strides = [1, 1]} : vector<16x96xf32> to vector<2x96xf32>
    %cst_21 = arith.constant dense<0.000000e+00> : vector<2x96xf32>
    %72 = tpu.matmul %69, %2, %cst_21 {dimension_numbers = #tpu.dot_dimension_numbers<[1], [0], [0], [1], [0, 0, 1, 1], [], []>} : vector<2x32xf32>, vector<32x96xf32>, vector<2x96xf32> -> vector<2x96xf32>
    %73 = arith.addf %72, %9 : vector<2x96xf32>
    %74 = vector.extract_strided_slice %71 {offsets = [0, 0], sizes = [2, 32], strides = [1, 1]} : vector<2x96xf32> to vector<2x32xf32>
    %75 = vector.extract_strided_slice %73 {offsets = [0, 0], sizes = [2, 32], strides = [1, 1]} : vector<2x96xf32> to vector<2x32xf32>
    %76 = arith.addf %74, %75 : vector<2x32xf32>
    %77 = arith.negf %76 : vector<2x32xf32>
    %78 = math.exp %77 : vector<2x32xf32>
    %cst_22 = arith.constant 1.000000e+00 : f32
    %79 = vector.broadcast %cst_22 : f32 to vector<2x32xf32>
    %80 = arith.addf %79, %78 : vector<2x32xf32>
    %81 = arith.divf %79, %80 : vector<2x32xf32>
    %82 = vector.extract_strided_slice %71 {offsets = [0, 32], sizes = [2, 32], strides = [1, 1]} : vector<2x96xf32> to vector<2x32xf32>
    %83 = vector.extract_strided_slice %73 {offsets = [0, 32], sizes = [2, 32], strides = [1, 1]} : vector<2x96xf32> to vector<2x32xf32>
    %84 = arith.addf %82, %83 : vector<2x32xf32>
    %85 = arith.negf %84 : vector<2x32xf32>
    %86 = math.exp %85 : vector<2x32xf32>
    %cst_23 = arith.constant 1.000000e+00 : f32
    %87 = vector.broadcast %cst_23 : f32 to vector<2x32xf32>
    %88 = arith.addf %87, %86 : vector<2x32xf32>
    %89 = arith.divf %87, %88 : vector<2x32xf32>
    %90 = vector.extract_strided_slice %71 {offsets = [0, 64], sizes = [2, 32], strides = [1, 1]} : vector<2x96xf32> to vector<2x32xf32>
    %91 = vector.extract_strided_slice %73 {offsets = [0, 64], sizes = [2, 32], strides = [1, 1]} : vector<2x96xf32> to vector<2x32xf32>
    %92 = arith.mulf %81, %91 : vector<2x32xf32>
    %93 = arith.addf %90, %92 : vector<2x32xf32>
    %94 = math.tanh %93 : vector<2x32xf32>
    %cst_24 = arith.constant 1.000000e+00 : f32
    %95 = vector.broadcast %cst_24 : f32 to vector<2x32xf32>
    %96 = arith.subf %95, %89 : vector<2x32xf32>
    %97 = arith.mulf %96, %94 : vector<2x32xf32>
    %98 = arith.mulf %89, %69 : vector<2x32xf32>
    %99 = arith.addf %97, %98 : vector<2x32xf32>
    %c4 = arith.constant 4 : index
    %c0_25 = arith.constant 0 : index
    %100 = vector.load %arg12[%c4, %c0_25] : memref<16x32xf32, #tpu.memory_space<vmem>>, vector<2x32xf32>
    tpu.vector_store %arg12[%c4, %c0_25], %99 {strides = array<i32>} : memref<16x32xf32, #tpu.memory_space<vmem>>, vector<2x32xf32>,
    %101 = vector.extract_strided_slice %7 {offsets = [6, 0], sizes = [2, 96], strides = [1, 1]} : vector<16x96xf32> to vector<2x96xf32>
    %cst_26 = arith.constant dense<0.000000e+00> : vector<2x96xf32>
    %102 = tpu.matmul %99, %2, %cst_26 {dimension_numbers = #tpu.dot_dimension_numbers<[1], [0], [0], [1], [0, 0, 1, 1], [], []>} : vector<2x32xf32>, vector<32x96xf32>, vector<2x96xf32> -> vector<2x96xf32>
    %103 = arith.addf %102, %9 : vector<2x96xf32>
    %104 = vector.extract_strided_slice %101 {offsets = [0, 0], sizes = [2, 32], strides = [1, 1]} : vector<2x96xf32> to vector<2x32xf32>
    %105 = vector.extract_strided_slice %103 {offsets = [0, 0], sizes = [2, 32], strides = [1, 1]} : vector<2x96xf32> to vector<2x32xf32>
    %106 = arith.addf %104, %105 : vector<2x32xf32>
    %107 = arith.negf %106 : vector<2x32xf32>
    %108 = math.exp %107 : vector<2x32xf32>
    %cst_27 = arith.constant 1.000000e+00 : f32
    %109 = vector.broadcast %cst_27 : f32 to vector<2x32xf32>
    %110 = arith.addf %109, %108 : vector<2x32xf32>
    %111 = arith.divf %109, %110 : vector<2x32xf32>
    %112 = vector.extract_strided_slice %101 {offsets = [0, 32], sizes = [2, 32], strides = [1, 1]} : vector<2x96xf32> to vector<2x32xf32>
    %113 = vector.extract_strided_slice %103 {offsets = [0, 32], sizes = [2, 32], strides = [1, 1]} : vector<2x96xf32> to vector<2x32xf32>
    %114 = arith.addf %112, %113 : vector<2x32xf32>
    %115 = arith.negf %114 : vector<2x32xf32>
    %116 = math.exp %115 : vector<2x32xf32>
    %cst_28 = arith.constant 1.000000e+00 : f32
    %117 = vector.broadcast %cst_28 : f32 to vector<2x32xf32>
    %118 = arith.addf %117, %116 : vector<2x32xf32>
    %119 = arith.divf %117, %118 : vector<2x32xf32>
    %120 = vector.extract_strided_slice %101 {offsets = [0, 64], sizes = [2, 32], strides = [1, 1]} : vector<2x96xf32> to vector<2x32xf32>
    %121 = vector.extract_strided_slice %103 {offsets = [0, 64], sizes = [2, 32], strides = [1, 1]} : vector<2x96xf32> to vector<2x32xf32>
    %122 = arith.mulf %111, %121 : vector<2x32xf32>
    %123 = arith.addf %120, %122 : vector<2x32xf32>
    %124 = math.tanh %123 : vector<2x32xf32>
    %cst_29 = arith.constant 1.000000e+00 : f32
    %125 = vector.broadcast %cst_29 : f32 to vector<2x32xf32>
    %126 = arith.subf %125, %119 : vector<2x32xf32>
    %127 = arith.mulf %126, %124 : vector<2x32xf32>
    %128 = arith.mulf %119, %99 : vector<2x32xf32>
    %129 = arith.addf %127, %128 : vector<2x32xf32>
    %c6 = arith.constant 6 : index
    %c0_30 = arith.constant 0 : index
    %130 = vector.load %arg12[%c6, %c0_30] : memref<16x32xf32, #tpu.memory_space<vmem>>, vector<2x32xf32>
    tpu.vector_store %arg12[%c6, %c0_30], %129 {strides = array<i32>} : memref<16x32xf32, #tpu.memory_space<vmem>>, vector<2x32xf32>,
    %131 = vector.extract_strided_slice %7 {offsets = [8, 0], sizes = [2, 96], strides = [1, 1]} : vector<16x96xf32> to vector<2x96xf32>
    %cst_31 = arith.constant dense<0.000000e+00> : vector<2x96xf32>
    %132 = tpu.matmul %129, %2, %cst_31 {dimension_numbers = #tpu.dot_dimension_numbers<[1], [0], [0], [1], [0, 0, 1, 1], [], []>} : vector<2x32xf32>, vector<32x96xf32>, vector<2x96xf32> -> vector<2x96xf32>
    %133 = arith.addf %132, %9 : vector<2x96xf32>
    %134 = vector.extract_strided_slice %131 {offsets = [0, 0], sizes = [2, 32], strides = [1, 1]} : vector<2x96xf32> to vector<2x32xf32>
    %135 = vector.extract_strided_slice %133 {offsets = [0, 0], sizes = [2, 32], strides = [1, 1]} : vector<2x96xf32> to vector<2x32xf32>
    %136 = arith.addf %134, %135 : vector<2x32xf32>
    %137 = arith.negf %136 : vector<2x32xf32>
    %138 = math.exp %137 : vector<2x32xf32>
    %cst_32 = arith.constant 1.000000e+00 : f32
    %139 = vector.broadcast %cst_32 : f32 to vector<2x32xf32>
    %140 = arith.addf %139, %138 : vector<2x32xf32>
    %141 = arith.divf %139, %140 : vector<2x32xf32>
    %142 = vector.extract_strided_slice %131 {offsets = [0, 32], sizes = [2, 32], strides = [1, 1]} : vector<2x96xf32> to vector<2x32xf32>
    %143 = vector.extract_strided_slice %133 {offsets = [0, 32], sizes = [2, 32], strides = [1, 1]} : vector<2x96xf32> to vector<2x32xf32>
    %144 = arith.addf %142, %143 : vector<2x32xf32>
    %145 = arith.negf %144 : vector<2x32xf32>
    %146 = math.exp %145 : vector<2x32xf32>
    %cst_33 = arith.constant 1.000000e+00 : f32
    %147 = vector.broadcast %cst_33 : f32 to vector<2x32xf32>
    %148 = arith.addf %147, %146 : vector<2x32xf32>
    %149 = arith.divf %147, %148 : vector<2x32xf32>
    %150 = vector.extract_strided_slice %131 {offsets = [0, 64], sizes = [2, 32], strides = [1, 1]} : vector<2x96xf32> to vector<2x32xf32>
    %151 = vector.extract_strided_slice %133 {offsets = [0, 64], sizes = [2, 32], strides = [1, 1]} : vector<2x96xf32> to vector<2x32xf32>
    %152 = arith.mulf %141, %151 : vector<2x32xf32>
    %153 = arith.addf %150, %152 : vector<2x32xf32>
    %154 = math.tanh %153 : vector<2x32xf32>
    %cst_34 = arith.constant 1.000000e+00 : f32
    %155 = vector.broadcast %cst_34 : f32 to vector<2x32xf32>
    %156 = arith.subf %155, %149 : vector<2x32xf32>
    %157 = arith.mulf %156, %154 : vector<2x32xf32>
    %158 = arith.mulf %149, %129 : vector<2x32xf32>
    %159 = arith.addf %157, %158 : vector<2x32xf32>
    %c8 = arith.constant 8 : index
    %c0_35 = arith.constant 0 : index
    %160 = vector.load %arg12[%c8, %c0_35] : memref<16x32xf32, #tpu.memory_space<vmem>>, vector<2x32xf32>
    tpu.vector_store %arg12[%c8, %c0_35], %159 {strides = array<i32>} : memref<16x32xf32, #tpu.memory_space<vmem>>, vector<2x32xf32>,
    %161 = vector.extract_strided_slice %7 {offsets = [10, 0], sizes = [2, 96], strides = [1, 1]} : vector<16x96xf32> to vector<2x96xf32>
    %cst_36 = arith.constant dense<0.000000e+00> : vector<2x96xf32>
    %162 = tpu.matmul %159, %2, %cst_36 {dimension_numbers = #tpu.dot_dimension_numbers<[1], [0], [0], [1], [0, 0, 1, 1], [], []>} : vector<2x32xf32>, vector<32x96xf32>, vector<2x96xf32> -> vector<2x96xf32>
    %163 = arith.addf %162, %9 : vector<2x96xf32>
    %164 = vector.extract_strided_slice %161 {offsets = [0, 0], sizes = [2, 32], strides = [1, 1]} : vector<2x96xf32> to vector<2x32xf32>
    %165 = vector.extract_strided_slice %163 {offsets = [0, 0], sizes = [2, 32], strides = [1, 1]} : vector<2x96xf32> to vector<2x32xf32>
    %166 = arith.addf %164, %165 : vector<2x32xf32>
    %167 = arith.negf %166 : vector<2x32xf32>
    %168 = math.exp %167 : vector<2x32xf32>
    %cst_37 = arith.constant 1.000000e+00 : f32
    %169 = vector.broadcast %cst_37 : f32 to vector<2x32xf32>
    %170 = arith.addf %169, %168 : vector<2x32xf32>
    %171 = arith.divf %169, %170 : vector<2x32xf32>
    %172 = vector.extract_strided_slice %161 {offsets = [0, 32], sizes = [2, 32], strides = [1, 1]} : vector<2x96xf32> to vector<2x32xf32>
    %173 = vector.extract_strided_slice %163 {offsets = [0, 32], sizes = [2, 32], strides = [1, 1]} : vector<2x96xf32> to vector<2x32xf32>
    %174 = arith.addf %172, %173 : vector<2x32xf32>
    %175 = arith.negf %174 : vector<2x32xf32>
    %176 = math.exp %175 : vector<2x32xf32>
    %cst_38 = arith.constant 1.000000e+00 : f32
    %177 = vector.broadcast %cst_38 : f32 to vector<2x32xf32>
    %178 = arith.addf %177, %176 : vector<2x32xf32>
    %179 = arith.divf %177, %178 : vector<2x32xf32>
    %180 = vector.extract_strided_slice %161 {offsets = [0, 64], sizes = [2, 32], strides = [1, 1]} : vector<2x96xf32> to vector<2x32xf32>
    %181 = vector.extract_strided_slice %163 {offsets = [0, 64], sizes = [2, 32], strides = [1, 1]} : vector<2x96xf32> to vector<2x32xf32>
    %182 = arith.mulf %171, %181 : vector<2x32xf32>
    %183 = arith.addf %180, %182 : vector<2x32xf32>
    %184 = math.tanh %183 : vector<2x32xf32>
    %cst_39 = arith.constant 1.000000e+00 : f32
    %185 = vector.broadcast %cst_39 : f32 to vector<2x32xf32>
    %186 = arith.subf %185, %179 : vector<2x32xf32>
    %187 = arith.mulf %186, %184 : vector<2x32xf32>
    %188 = arith.mulf %179, %159 : vector<2x32xf32>
    %189 = arith.addf %187, %188 : vector<2x32xf32>
    %c10 = arith.constant 10 : index
    %c0_40 = arith.constant 0 : index
    %190 = vector.load %arg12[%c10, %c0_40] : memref<16x32xf32, #tpu.memory_space<vmem>>, vector<2x32xf32>
    tpu.vector_store %arg12[%c10, %c0_40], %189 {strides = array<i32>} : memref<16x32xf32, #tpu.memory_space<vmem>>, vector<2x32xf32>,
    %191 = vector.extract_strided_slice %7 {offsets = [12, 0], sizes = [2, 96], strides = [1, 1]} : vector<16x96xf32> to vector<2x96xf32>
    %cst_41 = arith.constant dense<0.000000e+00> : vector<2x96xf32>
    %192 = tpu.matmul %189, %2, %cst_41 {dimension_numbers = #tpu.dot_dimension_numbers<[1], [0], [0], [1], [0, 0, 1, 1], [], []>} : vector<2x32xf32>, vector<32x96xf32>, vector<2x96xf32> -> vector<2x96xf32>
    %193 = arith.addf %192, %9 : vector<2x96xf32>
    %194 = vector.extract_strided_slice %191 {offsets = [0, 0], sizes = [2, 32], strides = [1, 1]} : vector<2x96xf32> to vector<2x32xf32>
    %195 = vector.extract_strided_slice %193 {offsets = [0, 0], sizes = [2, 32], strides = [1, 1]} : vector<2x96xf32> to vector<2x32xf32>
    %196 = arith.addf %194, %195 : vector<2x32xf32>
    %197 = arith.negf %196 : vector<2x32xf32>
    %198 = math.exp %197 : vector<2x32xf32>
    %cst_42 = arith.constant 1.000000e+00 : f32
    %199 = vector.broadcast %cst_42 : f32 to vector<2x32xf32>
    %200 = arith.addf %199, %198 : vector<2x32xf32>
    %201 = arith.divf %199, %200 : vector<2x32xf32>
    %202 = vector.extract_strided_slice %191 {offsets = [0, 32], sizes = [2, 32], strides = [1, 1]} : vector<2x96xf32> to vector<2x32xf32>
    %203 = vector.extract_strided_slice %193 {offsets = [0, 32], sizes = [2, 32], strides = [1, 1]} : vector<2x96xf32> to vector<2x32xf32>
    %204 = arith.addf %202, %203 : vector<2x32xf32>
    %205 = arith.negf %204 : vector<2x32xf32>
    %206 = math.exp %205 : vector<2x32xf32>
    %cst_43 = arith.constant 1.000000e+00 : f32
    %207 = vector.broadcast %cst_43 : f32 to vector<2x32xf32>
    %208 = arith.addf %207, %206 : vector<2x32xf32>
    %209 = arith.divf %207, %208 : vector<2x32xf32>
    %210 = vector.extract_strided_slice %191 {offsets = [0, 64], sizes = [2, 32], strides = [1, 1]} : vector<2x96xf32> to vector<2x32xf32>
    %211 = vector.extract_strided_slice %193 {offsets = [0, 64], sizes = [2, 32], strides = [1, 1]} : vector<2x96xf32> to vector<2x32xf32>
    %212 = arith.mulf %201, %211 : vector<2x32xf32>
    %213 = arith.addf %210, %212 : vector<2x32xf32>
    %214 = math.tanh %213 : vector<2x32xf32>
    %cst_44 = arith.constant 1.000000e+00 : f32
    %215 = vector.broadcast %cst_44 : f32 to vector<2x32xf32>
    %216 = arith.subf %215, %209 : vector<2x32xf32>
    %217 = arith.mulf %216, %214 : vector<2x32xf32>
    %218 = arith.mulf %209, %189 : vector<2x32xf32>
    %219 = arith.addf %217, %218 : vector<2x32xf32>
    %c12 = arith.constant 12 : index
    %c0_45 = arith.constant 0 : index
    %220 = vector.load %arg12[%c12, %c0_45] : memref<16x32xf32, #tpu.memory_space<vmem>>, vector<2x32xf32>
    tpu.vector_store %arg12[%c12, %c0_45], %219 {strides = array<i32>} : memref<16x32xf32, #tpu.memory_space<vmem>>, vector<2x32xf32>,
    %221 = vector.extract_strided_slice %7 {offsets = [14, 0], sizes = [2, 96], strides = [1, 1]} : vector<16x96xf32> to vector<2x96xf32>
    %cst_46 = arith.constant dense<0.000000e+00> : vector<2x96xf32>
    %222 = tpu.matmul %219, %2, %cst_46 {dimension_numbers = #tpu.dot_dimension_numbers<[1], [0], [0], [1], [0, 0, 1, 1], [], []>} : vector<2x32xf32>, vector<32x96xf32>, vector<2x96xf32> -> vector<2x96xf32>
    %223 = arith.addf %222, %9 : vector<2x96xf32>
    %224 = vector.extract_strided_slice %221 {offsets = [0, 0], sizes = [2, 32], strides = [1, 1]} : vector<2x96xf32> to vector<2x32xf32>
    %225 = vector.extract_strided_slice %223 {offsets = [0, 0], sizes = [2, 32], strides = [1, 1]} : vector<2x96xf32> to vector<2x32xf32>
    %226 = arith.addf %224, %225 : vector<2x32xf32>
    %227 = arith.negf %226 : vector<2x32xf32>
    %228 = math.exp %227 : vector<2x32xf32>
    %cst_47 = arith.constant 1.000000e+00 : f32
    %229 = vector.broadcast %cst_47 : f32 to vector<2x32xf32>
    %230 = arith.addf %229, %228 : vector<2x32xf32>
    %231 = arith.divf %229, %230 : vector<2x32xf32>
    %232 = vector.extract_strided_slice %221 {offsets = [0, 32], sizes = [2, 32], strides = [1, 1]} : vector<2x96xf32> to vector<2x32xf32>
    %233 = vector.extract_strided_slice %223 {offsets = [0, 32], sizes = [2, 32], strides = [1, 1]} : vector<2x96xf32> to vector<2x32xf32>
    %234 = arith.addf %232, %233 : vector<2x32xf32>
    %235 = arith.negf %234 : vector<2x32xf32>
    %236 = math.exp %235 : vector<2x32xf32>
    %cst_48 = arith.constant 1.000000e+00 : f32
    %237 = vector.broadcast %cst_48 : f32 to vector<2x32xf32>
    %238 = arith.addf %237, %236 : vector<2x32xf32>
    %239 = arith.divf %237, %238 : vector<2x32xf32>
    %240 = vector.extract_strided_slice %221 {offsets = [0, 64], sizes = [2, 32], strides = [1, 1]} : vector<2x96xf32> to vector<2x32xf32>
    %241 = vector.extract_strided_slice %223 {offsets = [0, 64], sizes = [2, 32], strides = [1, 1]} : vector<2x96xf32> to vector<2x32xf32>
    %242 = arith.mulf %231, %241 : vector<2x32xf32>
    %243 = arith.addf %240, %242 : vector<2x32xf32>
    %244 = math.tanh %243 : vector<2x32xf32>
    %cst_49 = arith.constant 1.000000e+00 : f32
    %245 = vector.broadcast %cst_49 : f32 to vector<2x32xf32>
    %246 = arith.subf %245, %239 : vector<2x32xf32>
    %247 = arith.mulf %246, %244 : vector<2x32xf32>
    %248 = arith.mulf %239, %219 : vector<2x32xf32>
    %249 = arith.addf %247, %248 : vector<2x32xf32>
    %c14 = arith.constant 14 : index
    %c0_50 = arith.constant 0 : index
    %250 = vector.load %arg12[%c14, %c0_50] : memref<16x32xf32, #tpu.memory_space<vmem>>, vector<2x32xf32>
    tpu.vector_store %arg12[%c14, %c0_50], %249 {strides = array<i32>} : memref<16x32xf32, #tpu.memory_space<vmem>>, vector<2x32xf32>,
    %c0_51 = arith.constant 0 : index
    %c0_52 = arith.constant 0 : index
    %251 = vector.load %arg12[%c0_51, %c0_52] : memref<16x32xf32, #tpu.memory_space<vmem>>, vector<16x32xf32>
    %c0_53 = arith.constant 0 : index
    %c0_54 = arith.constant 0 : index
    %252 = vector.load %arg5[%c0_53, %c0_54] : memref<32x96xf32, #tpu.memory_space<vmem>>, vector<32x96xf32>
    %c0_55 = arith.constant 0 : index
    %c0_56 = arith.constant 0 : index
    %253 = vector.load %arg6[%c0_55, %c0_56] : memref<32x96xf32, #tpu.memory_space<vmem>>, vector<32x96xf32>
    %c0_57 = arith.constant 0 : index
    %c0_58 = arith.constant 0 : index
    %254 = vector.load %arg7[%c0_57, %c0_58] : memref<1x96xf32, #tpu.memory_space<vmem>>, vector<1x96xf32>
    %c0_59 = arith.constant 0 : index
    %c0_60 = arith.constant 0 : index
    %255 = vector.load %arg8[%c0_59, %c0_60] : memref<1x96xf32, #tpu.memory_space<vmem>>, vector<1x96xf32>
    %cst_61 = arith.constant dense<0.000000e+00> : vector<16x96xf32>
    %256 = tpu.matmul %251, %252, %cst_61 {dimension_numbers = #tpu.dot_dimension_numbers<[1], [0], [0], [1], [0, 0, 1, 1], [], []>} : vector<16x32xf32>, vector<32x96xf32>, vector<16x96xf32> -> vector<16x96xf32>
    %257 = vector.broadcast %254 : vector<1x96xf32> to vector<16x96xf32>
    %258 = arith.addf %256, %257 : vector<16x96xf32>
    %259 = vector.shape_cast %255 : vector<1x96xf32> to vector<1x96xf32>
    %260 = vector.broadcast %259 : vector<1x96xf32> to vector<2x96xf32>
    %cst_62 = arith.constant 0.000000e+00 : f32
    %261 = vector.broadcast %cst_62 : f32 to vector<2x32xf32>
    %262 = vector.extract_strided_slice %258 {offsets = [0, 0], sizes = [2, 96], strides = [1, 1]} : vector<16x96xf32> to vector<2x96xf32>
    %cst_63 = arith.constant dense<0.000000e+00> : vector<2x96xf32>
    %263 = tpu.matmul %261, %253, %cst_63 {dimension_numbers = #tpu.dot_dimension_numbers<[1], [0], [0], [1], [0, 0, 1, 1], [], []>} : vector<2x32xf32>, vector<32x96xf32>, vector<2x96xf32> -> vector<2x96xf32>
    %264 = arith.addf %263, %260 : vector<2x96xf32>
    %265 = vector.extract_strided_slice %262 {offsets = [0, 0], sizes = [2, 32], strides = [1, 1]} : vector<2x96xf32> to vector<2x32xf32>
    %266 = vector.extract_strided_slice %264 {offsets = [0, 0], sizes = [2, 32], strides = [1, 1]} : vector<2x96xf32> to vector<2x32xf32>
    %267 = arith.addf %265, %266 : vector<2x32xf32>
    %268 = arith.negf %267 : vector<2x32xf32>
    %269 = math.exp %268 : vector<2x32xf32>
    %cst_64 = arith.constant 1.000000e+00 : f32
    %270 = vector.broadcast %cst_64 : f32 to vector<2x32xf32>
    %271 = arith.addf %270, %269 : vector<2x32xf32>
    %272 = arith.divf %270, %271 : vector<2x32xf32>
    %273 = vector.extract_strided_slice %262 {offsets = [0, 32], sizes = [2, 32], strides = [1, 1]} : vector<2x96xf32> to vector<2x32xf32>
    %274 = vector.extract_strided_slice %264 {offsets = [0, 32], sizes = [2, 32], strides = [1, 1]} : vector<2x96xf32> to vector<2x32xf32>
    %275 = arith.addf %273, %274 : vector<2x32xf32>
    %276 = arith.negf %275 : vector<2x32xf32>
    %277 = math.exp %276 : vector<2x32xf32>
    %cst_65 = arith.constant 1.000000e+00 : f32
    %278 = vector.broadcast %cst_65 : f32 to vector<2x32xf32>
    %279 = arith.addf %278, %277 : vector<2x32xf32>
    %280 = arith.divf %278, %279 : vector<2x32xf32>
    %281 = vector.extract_strided_slice %262 {offsets = [0, 64], sizes = [2, 32], strides = [1, 1]} : vector<2x96xf32> to vector<2x32xf32>
    %282 = vector.extract_strided_slice %264 {offsets = [0, 64], sizes = [2, 32], strides = [1, 1]} : vector<2x96xf32> to vector<2x32xf32>
    %283 = arith.mulf %272, %282 : vector<2x32xf32>
    %284 = arith.addf %281, %283 : vector<2x32xf32>
    %285 = math.tanh %284 : vector<2x32xf32>
    %cst_66 = arith.constant 1.000000e+00 : f32
    %286 = vector.broadcast %cst_66 : f32 to vector<2x32xf32>
    %287 = arith.subf %286, %280 : vector<2x32xf32>
    %288 = arith.mulf %287, %285 : vector<2x32xf32>
    %289 = arith.mulf %280, %261 : vector<2x32xf32>
    %290 = arith.addf %288, %289 : vector<2x32xf32>
    %291 = vector.extract_strided_slice %258 {offsets = [2, 0], sizes = [2, 96], strides = [1, 1]} : vector<16x96xf32> to vector<2x96xf32>
    %cst_67 = arith.constant dense<0.000000e+00> : vector<2x96xf32>
    %292 = tpu.matmul %290, %253, %cst_67 {dimension_numbers = #tpu.dot_dimension_numbers<[1], [0], [0], [1], [0, 0, 1, 1], [], []>} : vector<2x32xf32>, vector<32x96xf32>, vector<2x96xf32> -> vector<2x96xf32>
    %293 = arith.addf %292, %260 : vector<2x96xf32>
    %294 = vector.extract_strided_slice %291 {offsets = [0, 0], sizes = [2, 32], strides = [1, 1]} : vector<2x96xf32> to vector<2x32xf32>
    %295 = vector.extract_strided_slice %293 {offsets = [0, 0], sizes = [2, 32], strides = [1, 1]} : vector<2x96xf32> to vector<2x32xf32>
    %296 = arith.addf %294, %295 : vector<2x32xf32>
    %297 = arith.negf %296 : vector<2x32xf32>
    %298 = math.exp %297 : vector<2x32xf32>
    %cst_68 = arith.constant 1.000000e+00 : f32
    %299 = vector.broadcast %cst_68 : f32 to vector<2x32xf32>
    %300 = arith.addf %299, %298 : vector<2x32xf32>
    %301 = arith.divf %299, %300 : vector<2x32xf32>
    %302 = vector.extract_strided_slice %291 {offsets = [0, 32], sizes = [2, 32], strides = [1, 1]} : vector<2x96xf32> to vector<2x32xf32>
    %303 = vector.extract_strided_slice %293 {offsets = [0, 32], sizes = [2, 32], strides = [1, 1]} : vector<2x96xf32> to vector<2x32xf32>
    %304 = arith.addf %302, %303 : vector<2x32xf32>
    %305 = arith.negf %304 : vector<2x32xf32>
    %306 = math.exp %305 : vector<2x32xf32>
    %cst_69 = arith.constant 1.000000e+00 : f32
    %307 = vector.broadcast %cst_69 : f32 to vector<2x32xf32>
    %308 = arith.addf %307, %306 : vector<2x32xf32>
    %309 = arith.divf %307, %308 : vector<2x32xf32>
    %310 = vector.extract_strided_slice %291 {offsets = [0, 64], sizes = [2, 32], strides = [1, 1]} : vector<2x96xf32> to vector<2x32xf32>
    %311 = vector.extract_strided_slice %293 {offsets = [0, 64], sizes = [2, 32], strides = [1, 1]} : vector<2x96xf32> to vector<2x32xf32>
    %312 = arith.mulf %301, %311 : vector<2x32xf32>
    %313 = arith.addf %310, %312 : vector<2x32xf32>
    %314 = math.tanh %313 : vector<2x32xf32>
    %cst_70 = arith.constant 1.000000e+00 : f32
    %315 = vector.broadcast %cst_70 : f32 to vector<2x32xf32>
    %316 = arith.subf %315, %309 : vector<2x32xf32>
    %317 = arith.mulf %316, %314 : vector<2x32xf32>
    %318 = arith.mulf %309, %290 : vector<2x32xf32>
    %319 = arith.addf %317, %318 : vector<2x32xf32>
    %320 = vector.extract_strided_slice %258 {offsets = [4, 0], sizes = [2, 96], strides = [1, 1]} : vector<16x96xf32> to vector<2x96xf32>
    %cst_71 = arith.constant dense<0.000000e+00> : vector<2x96xf32>
    %321 = tpu.matmul %319, %253, %cst_71 {dimension_numbers = #tpu.dot_dimension_numbers<[1], [0], [0], [1], [0, 0, 1, 1], [], []>} : vector<2x32xf32>, vector<32x96xf32>, vector<2x96xf32> -> vector<2x96xf32>
    %322 = arith.addf %321, %260 : vector<2x96xf32>
    %323 = vector.extract_strided_slice %320 {offsets = [0, 0], sizes = [2, 32], strides = [1, 1]} : vector<2x96xf32> to vector<2x32xf32>
    %324 = vector.extract_strided_slice %322 {offsets = [0, 0], sizes = [2, 32], strides = [1, 1]} : vector<2x96xf32> to vector<2x32xf32>
    %325 = arith.addf %323, %324 : vector<2x32xf32>
    %326 = arith.negf %325 : vector<2x32xf32>
    %327 = math.exp %326 : vector<2x32xf32>
    %cst_72 = arith.constant 1.000000e+00 : f32
    %328 = vector.broadcast %cst_72 : f32 to vector<2x32xf32>
    %329 = arith.addf %328, %327 : vector<2x32xf32>
    %330 = arith.divf %328, %329 : vector<2x32xf32>
    %331 = vector.extract_strided_slice %320 {offsets = [0, 32], sizes = [2, 32], strides = [1, 1]} : vector<2x96xf32> to vector<2x32xf32>
    %332 = vector.extract_strided_slice %322 {offsets = [0, 32], sizes = [2, 32], strides = [1, 1]} : vector<2x96xf32> to vector<2x32xf32>
    %333 = arith.addf %331, %332 : vector<2x32xf32>
    %334 = arith.negf %333 : vector<2x32xf32>
    %335 = math.exp %334 : vector<2x32xf32>
    %cst_73 = arith.constant 1.000000e+00 : f32
    %336 = vector.broadcast %cst_73 : f32 to vector<2x32xf32>
    %337 = arith.addf %336, %335 : vector<2x32xf32>
    %338 = arith.divf %336, %337 : vector<2x32xf32>
    %339 = vector.extract_strided_slice %320 {offsets = [0, 64], sizes = [2, 32], strides = [1, 1]} : vector<2x96xf32> to vector<2x32xf32>
    %340 = vector.extract_strided_slice %322 {offsets = [0, 64], sizes = [2, 32], strides = [1, 1]} : vector<2x96xf32> to vector<2x32xf32>
    %341 = arith.mulf %330, %340 : vector<2x32xf32>
    %342 = arith.addf %339, %341 : vector<2x32xf32>
    %343 = math.tanh %342 : vector<2x32xf32>
    %cst_74 = arith.constant 1.000000e+00 : f32
    %344 = vector.broadcast %cst_74 : f32 to vector<2x32xf32>
    %345 = arith.subf %344, %338 : vector<2x32xf32>
    %346 = arith.mulf %345, %343 : vector<2x32xf32>
    %347 = arith.mulf %338, %319 : vector<2x32xf32>
    %348 = arith.addf %346, %347 : vector<2x32xf32>
    %349 = vector.extract_strided_slice %258 {offsets = [6, 0], sizes = [2, 96], strides = [1, 1]} : vector<16x96xf32> to vector<2x96xf32>
    %cst_75 = arith.constant dense<0.000000e+00> : vector<2x96xf32>
    %350 = tpu.matmul %348, %253, %cst_75 {dimension_numbers = #tpu.dot_dimension_numbers<[1], [0], [0], [1], [0, 0, 1, 1], [], []>} : vector<2x32xf32>, vector<32x96xf32>, vector<2x96xf32> -> vector<2x96xf32>
    %351 = arith.addf %350, %260 : vector<2x96xf32>
    %352 = vector.extract_strided_slice %349 {offsets = [0, 0], sizes = [2, 32], strides = [1, 1]} : vector<2x96xf32> to vector<2x32xf32>
    %353 = vector.extract_strided_slice %351 {offsets = [0, 0], sizes = [2, 32], strides = [1, 1]} : vector<2x96xf32> to vector<2x32xf32>
    %354 = arith.addf %352, %353 : vector<2x32xf32>
    %355 = arith.negf %354 : vector<2x32xf32>
    %356 = math.exp %355 : vector<2x32xf32>
    %cst_76 = arith.constant 1.000000e+00 : f32
    %357 = vector.broadcast %cst_76 : f32 to vector<2x32xf32>
    %358 = arith.addf %357, %356 : vector<2x32xf32>
    %359 = arith.divf %357, %358 : vector<2x32xf32>
    %360 = vector.extract_strided_slice %349 {offsets = [0, 32], sizes = [2, 32], strides = [1, 1]} : vector<2x96xf32> to vector<2x32xf32>
    %361 = vector.extract_strided_slice %351 {offsets = [0, 32], sizes = [2, 32], strides = [1, 1]} : vector<2x96xf32> to vector<2x32xf32>
    %362 = arith.addf %360, %361 : vector<2x32xf32>
    %363 = arith.negf %362 : vector<2x32xf32>
    %364 = math.exp %363 : vector<2x32xf32>
    %cst_77 = arith.constant 1.000000e+00 : f32
    %365 = vector.broadcast %cst_77 : f32 to vector<2x32xf32>
    %366 = arith.addf %365, %364 : vector<2x32xf32>
    %367 = arith.divf %365, %366 : vector<2x32xf32>
    %368 = vector.extract_strided_slice %349 {offsets = [0, 64], sizes = [2, 32], strides = [1, 1]} : vector<2x96xf32> to vector<2x32xf32>
    %369 = vector.extract_strided_slice %351 {offsets = [0, 64], sizes = [2, 32], strides = [1, 1]} : vector<2x96xf32> to vector<2x32xf32>
    %370 = arith.mulf %359, %369 : vector<2x32xf32>
    %371 = arith.addf %368, %370 : vector<2x32xf32>
    %372 = math.tanh %371 : vector<2x32xf32>
    %cst_78 = arith.constant 1.000000e+00 : f32
    %373 = vector.broadcast %cst_78 : f32 to vector<2x32xf32>
    %374 = arith.subf %373, %367 : vector<2x32xf32>
    %375 = arith.mulf %374, %372 : vector<2x32xf32>
    %376 = arith.mulf %367, %348 : vector<2x32xf32>
    %377 = arith.addf %375, %376 : vector<2x32xf32>
    %378 = vector.extract_strided_slice %258 {offsets = [8, 0], sizes = [2, 96], strides = [1, 1]} : vector<16x96xf32> to vector<2x96xf32>
    %cst_79 = arith.constant dense<0.000000e+00> : vector<2x96xf32>
    %379 = tpu.matmul %377, %253, %cst_79 {dimension_numbers = #tpu.dot_dimension_numbers<[1], [0], [0], [1], [0, 0, 1, 1], [], []>} : vector<2x32xf32>, vector<32x96xf32>, vector<2x96xf32> -> vector<2x96xf32>
    %380 = arith.addf %379, %260 : vector<2x96xf32>
    %381 = vector.extract_strided_slice %378 {offsets = [0, 0], sizes = [2, 32], strides = [1, 1]} : vector<2x96xf32> to vector<2x32xf32>
    %382 = vector.extract_strided_slice %380 {offsets = [0, 0], sizes = [2, 32], strides = [1, 1]} : vector<2x96xf32> to vector<2x32xf32>
    %383 = arith.addf %381, %382 : vector<2x32xf32>
    %384 = arith.negf %383 : vector<2x32xf32>
    %385 = math.exp %384 : vector<2x32xf32>
    %cst_80 = arith.constant 1.000000e+00 : f32
    %386 = vector.broadcast %cst_80 : f32 to vector<2x32xf32>
    %387 = arith.addf %386, %385 : vector<2x32xf32>
    %388 = arith.divf %386, %387 : vector<2x32xf32>
    %389 = vector.extract_strided_slice %378 {offsets = [0, 32], sizes = [2, 32], strides = [1, 1]} : vector<2x96xf32> to vector<2x32xf32>
    %390 = vector.extract_strided_slice %380 {offsets = [0, 32], sizes = [2, 32], strides = [1, 1]} : vector<2x96xf32> to vector<2x32xf32>
    %391 = arith.addf %389, %390 : vector<2x32xf32>
    %392 = arith.negf %391 : vector<2x32xf32>
    %393 = math.exp %392 : vector<2x32xf32>
    %cst_81 = arith.constant 1.000000e+00 : f32
    %394 = vector.broadcast %cst_81 : f32 to vector<2x32xf32>
    %395 = arith.addf %394, %393 : vector<2x32xf32>
    %396 = arith.divf %394, %395 : vector<2x32xf32>
    %397 = vector.extract_strided_slice %378 {offsets = [0, 64], sizes = [2, 32], strides = [1, 1]} : vector<2x96xf32> to vector<2x32xf32>
    %398 = vector.extract_strided_slice %380 {offsets = [0, 64], sizes = [2, 32], strides = [1, 1]} : vector<2x96xf32> to vector<2x32xf32>
    %399 = arith.mulf %388, %398 : vector<2x32xf32>
    %400 = arith.addf %397, %399 : vector<2x32xf32>
    %401 = math.tanh %400 : vector<2x32xf32>
    %cst_82 = arith.constant 1.000000e+00 : f32
    %402 = vector.broadcast %cst_82 : f32 to vector<2x32xf32>
    %403 = arith.subf %402, %396 : vector<2x32xf32>
    %404 = arith.mulf %403, %401 : vector<2x32xf32>
    %405 = arith.mulf %396, %377 : vector<2x32xf32>
    %406 = arith.addf %404, %405 : vector<2x32xf32>
    %407 = vector.extract_strided_slice %258 {offsets = [10, 0], sizes = [2, 96], strides = [1, 1]} : vector<16x96xf32> to vector<2x96xf32>
    %cst_83 = arith.constant dense<0.000000e+00> : vector<2x96xf32>
    %408 = tpu.matmul %406, %253, %cst_83 {dimension_numbers = #tpu.dot_dimension_numbers<[1], [0], [0], [1], [0, 0, 1, 1], [], []>} : vector<2x32xf32>, vector<32x96xf32>, vector<2x96xf32> -> vector<2x96xf32>
    %409 = arith.addf %408, %260 : vector<2x96xf32>
    %410 = vector.extract_strided_slice %407 {offsets = [0, 0], sizes = [2, 32], strides = [1, 1]} : vector<2x96xf32> to vector<2x32xf32>
    %411 = vector.extract_strided_slice %409 {offsets = [0, 0], sizes = [2, 32], strides = [1, 1]} : vector<2x96xf32> to vector<2x32xf32>
    %412 = arith.addf %410, %411 : vector<2x32xf32>
    %413 = arith.negf %412 : vector<2x32xf32>
    %414 = math.exp %413 : vector<2x32xf32>
    %cst_84 = arith.constant 1.000000e+00 : f32
    %415 = vector.broadcast %cst_84 : f32 to vector<2x32xf32>
    %416 = arith.addf %415, %414 : vector<2x32xf32>
    %417 = arith.divf %415, %416 : vector<2x32xf32>
    %418 = vector.extract_strided_slice %407 {offsets = [0, 32], sizes = [2, 32], strides = [1, 1]} : vector<2x96xf32> to vector<2x32xf32>
    %419 = vector.extract_strided_slice %409 {offsets = [0, 32], sizes = [2, 32], strides = [1, 1]} : vector<2x96xf32> to vector<2x32xf32>
    %420 = arith.addf %418, %419 : vector<2x32xf32>
    %421 = arith.negf %420 : vector<2x32xf32>
    %422 = math.exp %421 : vector<2x32xf32>
    %cst_85 = arith.constant 1.000000e+00 : f32
    %423 = vector.broadcast %cst_85 : f32 to vector<2x32xf32>
    %424 = arith.addf %423, %422 : vector<2x32xf32>
    %425 = arith.divf %423, %424 : vector<2x32xf32>
    %426 = vector.extract_strided_slice %407 {offsets = [0, 64], sizes = [2, 32], strides = [1, 1]} : vector<2x96xf32> to vector<2x32xf32>
    %427 = vector.extract_strided_slice %409 {offsets = [0, 64], sizes = [2, 32], strides = [1, 1]} : vector<2x96xf32> to vector<2x32xf32>
    %428 = arith.mulf %417, %427 : vector<2x32xf32>
    %429 = arith.addf %426, %428 : vector<2x32xf32>
    %430 = math.tanh %429 : vector<2x32xf32>
    %cst_86 = arith.constant 1.000000e+00 : f32
    %431 = vector.broadcast %cst_86 : f32 to vector<2x32xf32>
    %432 = arith.subf %431, %425 : vector<2x32xf32>
    %433 = arith.mulf %432, %430 : vector<2x32xf32>
    %434 = arith.mulf %425, %406 : vector<2x32xf32>
    %435 = arith.addf %433, %434 : vector<2x32xf32>
    %436 = vector.extract_strided_slice %258 {offsets = [12, 0], sizes = [2, 96], strides = [1, 1]} : vector<16x96xf32> to vector<2x96xf32>
    %cst_87 = arith.constant dense<0.000000e+00> : vector<2x96xf32>
    %437 = tpu.matmul %435, %253, %cst_87 {dimension_numbers = #tpu.dot_dimension_numbers<[1], [0], [0], [1], [0, 0, 1, 1], [], []>} : vector<2x32xf32>, vector<32x96xf32>, vector<2x96xf32> -> vector<2x96xf32>
    %438 = arith.addf %437, %260 : vector<2x96xf32>
    %439 = vector.extract_strided_slice %436 {offsets = [0, 0], sizes = [2, 32], strides = [1, 1]} : vector<2x96xf32> to vector<2x32xf32>
    %440 = vector.extract_strided_slice %438 {offsets = [0, 0], sizes = [2, 32], strides = [1, 1]} : vector<2x96xf32> to vector<2x32xf32>
    %441 = arith.addf %439, %440 : vector<2x32xf32>
    %442 = arith.negf %441 : vector<2x32xf32>
    %443 = math.exp %442 : vector<2x32xf32>
    %cst_88 = arith.constant 1.000000e+00 : f32
    %444 = vector.broadcast %cst_88 : f32 to vector<2x32xf32>
    %445 = arith.addf %444, %443 : vector<2x32xf32>
    %446 = arith.divf %444, %445 : vector<2x32xf32>
    %447 = vector.extract_strided_slice %436 {offsets = [0, 32], sizes = [2, 32], strides = [1, 1]} : vector<2x96xf32> to vector<2x32xf32>
    %448 = vector.extract_strided_slice %438 {offsets = [0, 32], sizes = [2, 32], strides = [1, 1]} : vector<2x96xf32> to vector<2x32xf32>
    %449 = arith.addf %447, %448 : vector<2x32xf32>
    %450 = arith.negf %449 : vector<2x32xf32>
    %451 = math.exp %450 : vector<2x32xf32>
    %cst_89 = arith.constant 1.000000e+00 : f32
    %452 = vector.broadcast %cst_89 : f32 to vector<2x32xf32>
    %453 = arith.addf %452, %451 : vector<2x32xf32>
    %454 = arith.divf %452, %453 : vector<2x32xf32>
    %455 = vector.extract_strided_slice %436 {offsets = [0, 64], sizes = [2, 32], strides = [1, 1]} : vector<2x96xf32> to vector<2x32xf32>
    %456 = vector.extract_strided_slice %438 {offsets = [0, 64], sizes = [2, 32], strides = [1, 1]} : vector<2x96xf32> to vector<2x32xf32>
    %457 = arith.mulf %446, %456 : vector<2x32xf32>
    %458 = arith.addf %455, %457 : vector<2x32xf32>
    %459 = math.tanh %458 : vector<2x32xf32>
    %cst_90 = arith.constant 1.000000e+00 : f32
    %460 = vector.broadcast %cst_90 : f32 to vector<2x32xf32>
    %461 = arith.subf %460, %454 : vector<2x32xf32>
    %462 = arith.mulf %461, %459 : vector<2x32xf32>
    %463 = arith.mulf %454, %435 : vector<2x32xf32>
    %464 = arith.addf %462, %463 : vector<2x32xf32>
    %465 = vector.extract_strided_slice %258 {offsets = [14, 0], sizes = [2, 96], strides = [1, 1]} : vector<16x96xf32> to vector<2x96xf32>
    %cst_91 = arith.constant dense<0.000000e+00> : vector<2x96xf32>
    %466 = tpu.matmul %464, %253, %cst_91 {dimension_numbers = #tpu.dot_dimension_numbers<[1], [0], [0], [1], [0, 0, 1, 1], [], []>} : vector<2x32xf32>, vector<32x96xf32>, vector<2x96xf32> -> vector<2x96xf32>
    %467 = arith.addf %466, %260 : vector<2x96xf32>
    %468 = vector.extract_strided_slice %465 {offsets = [0, 0], sizes = [2, 32], strides = [1, 1]} : vector<2x96xf32> to vector<2x32xf32>
    %469 = vector.extract_strided_slice %467 {offsets = [0, 0], sizes = [2, 32], strides = [1, 1]} : vector<2x96xf32> to vector<2x32xf32>
    %470 = arith.addf %468, %469 : vector<2x32xf32>
    %471 = arith.negf %470 : vector<2x32xf32>
    %472 = math.exp %471 : vector<2x32xf32>
    %cst_92 = arith.constant 1.000000e+00 : f32
    %473 = vector.broadcast %cst_92 : f32 to vector<2x32xf32>
    %474 = arith.addf %473, %472 : vector<2x32xf32>
    %475 = arith.divf %473, %474 : vector<2x32xf32>
    %476 = vector.extract_strided_slice %465 {offsets = [0, 32], sizes = [2, 32], strides = [1, 1]} : vector<2x96xf32> to vector<2x32xf32>
    %477 = vector.extract_strided_slice %467 {offsets = [0, 32], sizes = [2, 32], strides = [1, 1]} : vector<2x96xf32> to vector<2x32xf32>
    %478 = arith.addf %476, %477 : vector<2x32xf32>
    %479 = arith.negf %478 : vector<2x32xf32>
    %480 = math.exp %479 : vector<2x32xf32>
    %cst_93 = arith.constant 1.000000e+00 : f32
    %481 = vector.broadcast %cst_93 : f32 to vector<2x32xf32>
    %482 = arith.addf %481, %480 : vector<2x32xf32>
    %483 = arith.divf %481, %482 : vector<2x32xf32>
    %484 = vector.extract_strided_slice %465 {offsets = [0, 64], sizes = [2, 32], strides = [1, 1]} : vector<2x96xf32> to vector<2x32xf32>
    %485 = vector.extract_strided_slice %467 {offsets = [0, 64], sizes = [2, 32], strides = [1, 1]} : vector<2x96xf32> to vector<2x32xf32>
    %486 = arith.mulf %475, %485 : vector<2x32xf32>
    %487 = arith.addf %484, %486 : vector<2x32xf32>
    %488 = math.tanh %487 : vector<2x32xf32>
    %cst_94 = arith.constant 1.000000e+00 : f32
    %489 = vector.broadcast %cst_94 : f32 to vector<2x32xf32>
    %490 = arith.subf %489, %483 : vector<2x32xf32>
    %491 = arith.mulf %490, %488 : vector<2x32xf32>
    %492 = arith.mulf %483, %464 : vector<2x32xf32>
    %493 = arith.addf %491, %492 : vector<2x32xf32>
    %cst_95 = arith.constant 0.000000e+00 : f32
    %494 = vector.broadcast %cst_95 : f32 to vector<2x32xf32>
    %495 = arith.maximumf %493, %494 : vector<2x32xf32>
    %c0_96 = arith.constant 0 : index
    %c0_97 = arith.constant 0 : index
    %496 = vector.load %arg9[%c0_96, %c0_97] : memref<32x16xf32, #tpu.memory_space<vmem>>, vector<32x16xf32>
    %cst_98 = arith.constant dense<0.000000e+00> : vector<2x16xf32>
    %497 = tpu.matmul %495, %496, %cst_98 {dimension_numbers = #tpu.dot_dimension_numbers<[1], [0], [0], [1], [0, 0, 1, 1], [], []>} : vector<2x32xf32>, vector<32x16xf32>, vector<2x16xf32> -> vector<2x16xf32>
    %c0_99 = arith.constant 0 : index
    %c0_100 = arith.constant 0 : index
    %498 = vector.load %arg10[%c0_99, %c0_100] : memref<1x16xf32, #tpu.memory_space<vmem>>, vector<1x16xf32>
    %499 = vector.broadcast %498 : vector<1x16xf32> to vector<2x16xf32>
    %500 = arith.addf %497, %499 : vector<2x16xf32>
    %c0_101 = arith.constant 0 : index
    %c0_102 = arith.constant 0 : index
    %501 = vector.load %arg11[%c0_101, %c0_102] : memref<2x16xf32, #tpu.memory_space<vmem>>, vector<2x16xf32>
    tpu.vector_store %arg11[%c0_101, %c0_102], %500 {strides = array<i32>} : memref<2x16xf32, #tpu.memory_space<vmem>>, vector<2x16xf32>,
    return
  }
}

</mosaic_0001>

<llo_original>
// kernel: tpu_custom_call.1
$region0: #{tpu_custom_call.1}
  #allocation0 [shape = 'u32[]', space=smem, size = 0x4, offset = 0x4, fixed_abs, tag = 'smem constant byte address 0x4 - core index']
  #allocation1 [shape = 'u32[144,128]{1,0:T(1,128)}', space=vmem, size = 0x12000, scoped, tag = 'internal scratch']
  #allocation2 [shape = 'f32[16,32]{1,0:T(8,128)}', space=vmem, size = 0x2000, scoped, tag = 'scratch operand']
  %s0 = inlined_call_operand.vmem [shape: f32[16,8], index: 0, kind: input, shape index: {}]
  %s1 = inlined_call_operand.hbm [shape: f32[8,96], index: 1, kind: input, shape index: {}]
  %s2 = inlined_call_operand.vmem [shape: f32[32,96], index: 2, kind: input, shape index: {}]
  %s3 = inlined_call_operand.vmem [shape: f32[1,96], index: 3, kind: input, shape index: {}]
  %s4 = inlined_call_operand.vmem [shape: f32[1,96], index: 4, kind: input, shape index: {}]
  %s5 = inlined_call_operand.vmem [shape: f32[32,96], index: 5, kind: input, shape index: {}]
  %s6 = inlined_call_operand.hbm [shape: f32[32,96], index: 6, kind: input, shape index: {}]
  %s7 = inlined_call_operand.vmem [shape: f32[1,96], index: 7, kind: input, shape index: {}]
  %s8 = inlined_call_operand.vmem [shape: f32[1,96], index: 8, kind: input, shape index: {}]
  %s9 = inlined_call_operand.vmem [shape: f32[32,16], index: 9, kind: input, shape index: {}]
  %s10 = inlined_call_operand.vmem [shape: f32[1,16], index: 10, kind: input, shape index: {}]
  %s11 = inlined_call_operand.hbm [shape: f32[2,16], index: 11, kind: output, shape index: {}]
  %s12 = sld [smem:[#allocation0]]
  $region62: #{tpu_custom_call.1} parent=0
    _
  %s14 = ssub.s32 1, %s12
  %s15 = scalar_select 0, %s14, %s12
  $region1: #{tpu_custom_call.1} parent=0
    #allocation3 [shape = 'u8[4096]{0}', space=vmem, size = 0x1000, scoped, tag = 'input window, operand 1, single buffered']
    #allocation4 [shape = 's32[1]{0}', space=sflag, size = 0x4, scoped, tag = 'scoped memory for tpu_custom_call.1']
    #allocation5 [shape = 's32[1]{0}', space=sflag, size = 0x4, scoped, tag = 'scoped memory for tpu_custom_call.1']
    #allocation6 [shape = 'u8[16384]{0}', space=vmem, size = 0x4000, scoped, tag = 'input window, operand 6, single buffered']
    #allocation7 [shape = 's32[1]{0}', space=sflag, size = 0x4, scoped, tag = 'scoped memory for tpu_custom_call.1']
    #allocation8 [shape = 'u8[1024]{0}', space=vmem, size = 0x400, scoped, tag = 'output window, operand 0, single buffered']
    %16 = vsyncpa [#allocation4], 0
    %17 = vsyncpa [#allocation7], 0
    %18 = vsyncpa [#allocation5], 0
    // Predicated region
    $region2: #{tpu_custom_call.1} parent=1 // pred_check
      _
    $region3: #{tpu_custom_call.1} parent=1 // pred_check_branch
      %20 = sbr.rel (0) target = $region5
    $region4: #{tpu_custom_call.1} parent=1 // pred_region
      _
    $region5: #{tpu_custom_call.1} parent=1 // pred_fallthru
      _
    // Predicated region
    $region6: #{tpu_custom_call.1} parent=1 // pred_check
      _
    $region7: #{tpu_custom_call.1} parent=1 // pred_check_branch
      %22 = sbr.rel (0) target = $region9
    $region8: #{tpu_custom_call.1} parent=1 // pred_region
      %s24 = ssub.s32 128, 128
      %25 = vsyncadd [#allocation4], %s24
      %s27 = sshll.u32 [#allocation3], 4
      %s28 = int_to_ptr.vmem [resolvable:$true] %s27
      %30 = dma.hbm_to_vmem [thread:$0]  %s1, 128, %s28, [#allocation4]
    $region9: #{tpu_custom_call.1} parent=1 // pred_fallthru
      _
    // Predicated region
    $region10: #{tpu_custom_call.1} parent=1 // pred_check
      _
    $region11: #{tpu_custom_call.1} parent=1 // pred_check_branch
      %32 = sbr.rel (0) target = $region13
    $region12: #{tpu_custom_call.1} parent=1 // pred_region
      _
    $region13: #{tpu_custom_call.1} parent=1 // pred_fallthru
      _
    // Predicated region
    $region14: #{tpu_custom_call.1} parent=1 // pred_check
      _
    $region15: #{tpu_custom_call.1} parent=1 // pred_check_branch
      %34 = sbr.rel (0) target = $region17
    $region16: #{tpu_custom_call.1} parent=1 // pred_region
      _
    $region17: #{tpu_custom_call.1} parent=1 // pred_fallthru
      _
    // Predicated region
    $region18: #{tpu_custom_call.1} parent=1 // pred_check
      _
    $region19: #{tpu_custom_call.1} parent=1 // pred_check_branch
      %36 = sbr.rel (0) target = $region21
    $region20: #{tpu_custom_call.1} parent=1 // pred_region
      _
    $region21: #{tpu_custom_call.1} parent=1 // pred_fallthru
      _
    // Predicated region
    $region22: #{tpu_custom_call.1} parent=1 // pred_check
      _
    $region23: #{tpu_custom_call.1} parent=1 // pred_check_branch
      %38 = sbr.rel (0) target = $region25
    $region24: #{tpu_custom_call.1} parent=1 // pred_region
      _
    $region25: #{tpu_custom_call.1} parent=1 // pred_fallthru
      _
    // Predicated region
    $region26: #{tpu_custom_call.1} parent=1 // pred_check
      _
    $region27: #{tpu_custom_call.1} parent=1 // pred_check_branch
      %40 = sbr.rel (0) target = $region29
    $region28: #{tpu_custom_call.1} parent=1 // pred_region
      %s42 = ssub.s32 512, 512
      %43 = vsyncadd [#allocation7], %s42
      %s44 = sshll.u32 [#allocation6], 4
      %s45 = int_to_ptr.vmem [resolvable:$true] %s44
      %50 = dma.hbm_to_vmem [thread:$0]  %s6, 512, %s45, [#allocation7], 128, 128, 8
    $region29: #{tpu_custom_call.1} parent=1 // pred_fallthru
      _
    // Predicated region
    $region30: #{tpu_custom_call.1} parent=1 // pred_check
      _
    $region31: #{tpu_custom_call.1} parent=1 // pred_check_branch
      %52 = sbr.rel (0) target = $region33
    $region32: #{tpu_custom_call.1} parent=1 // pred_region
      _
    $region33: #{tpu_custom_call.1} parent=1 // pred_fallthru
      _
    // Predicated region
    $region34: #{tpu_custom_call.1} parent=1 // pred_check
      _
    $region35: #{tpu_custom_call.1} parent=1 // pred_check_branch
      %54 = sbr.rel (0) target = $region37
    $region36: #{tpu_custom_call.1} parent=1 // pred_region
      _
    $region37: #{tpu_custom_call.1} parent=1 // pred_fallthru
      _
    // Predicated region
    $region38: #{tpu_custom_call.1} parent=1 // pred_check
      _
    $region39: #{tpu_custom_call.1} parent=1 // pred_check_branch
      %56 = sbr.rel (0) target = $region41
    $region40: #{tpu_custom_call.1} parent=1 // pred_region
      _
    $region41: #{tpu_custom_call.1} parent=1 // pred_fallthru
      _
    // Predicated region
    $region42: #{tpu_custom_call.1} parent=1 // pred_check
      _
    $region43: #{tpu_custom_call.1} parent=1 // pred_check_branch
      %58 = sbr.rel (0) target = $region45
    $region44: #{tpu_custom_call.1} parent=1 // pred_region
      _
    $region45: #{tpu_custom_call.1} parent=1 // pred_fallthru
      _
    // Predicated region
    $region46: #{tpu_custom_call.1} parent=1 // pred_check
      _
    $region47: #{tpu_custom_call.1} parent=1 // pred_check_branch
      %60 = sbr.rel (0) target = $region49
    $region48: #{tpu_custom_call.1} parent=1 // pred_region
      %61 = dma.done [#allocation4], 128
    $region49: #{tpu_custom_call.1} parent=1 // pred_fallthru
      _
    // Predicated region
    $region50: #{tpu_custom_call.1} parent=1 // pred_check
      _
    $region51: #{tpu_custom_call.1} parent=1 // pred_check_branch
      %63 = sbr.rel (0) target = $region53
    $region52: #{tpu_custom_call.1} parent=1 // pred_region
      %64 = dma.done [#allocation7], 512
    $region53: #{tpu_custom_call.1} parent=1 // pred_fallthru
      _
    %v65 = vld [vmem:[%s0] sm:$0xff]
    %v66 = vld [vmem:[%s0 + $0x8] sm:$0xff]
    %v67 = vld [vmem:[#allocation3] sm:$0xff]
    %v68 = vld [vmem:[%s2] sm:$0xff]
    %v69 = vld [vmem:[%s2 + $0x8] sm:$0xff]
    %v70 = vld [vmem:[%s2 + $0x10] sm:$0xff]
    %v71 = vld [vmem:[%s2 + $0x18] sm:$0xff]
    %v72 = vld [vmem:[%s3] sm:$0x1]
    %v73 = vld [vmem:[%s4] sm:$0x1]
    %v75 = vlaneseq
    %v76 = vshrl.u32 %v75, 7
    %v77 = vsub.s32 0, %v76
    %v78 = vrot.slane %v72, %v77
    %vm80 = vcmask 64512
    %v82 = vsel %vm80, %v65, 0
    %v85 = vsel %vm80, %v66, 0
    %87 = vmatprep.subr.mxu0 0.0
    %88 = vmatpush1.msra.mxu0 %v67
    %89 = vmatprep.subr.mxu0 0.0
    %90 = vmatpush1.msra.mxu0 0.0
    %91 = vmatprep.subr.mxu0 0.0
    %92 = vmatpush1.msra.mxu0 0.0
    %93 = vmatprep.subr.mxu0 0.0
    %94 = vmatpush1.msra.mxu0 0.0
    %95 = vmatprep.subr.mxu0 0.0
    %96 = vmatpush1.msra.mxu0 0.0
    %97 = vmatprep.subr.mxu0 0.0
    %98 = vmatpush1.msra.mxu0 0.0
    %99 = vmatprep.subr.mxu0 0.0
    %100 = vmatpush1.msra.mxu0 0.0
    %101 = vmatprep.subr.mxu0 0.0
    %102 = vmatpush1.msra.mxu0 0.0
    %103 = vmatprep.subr.mxu0 0.0
    %104 = vmatpush1.msra.mxu0 0.0
    %105 = vmatprep.subr.mxu0 0.0
    %106 = vmatpush1.msra.mxu0 0.0
    %107 = vmatprep.subr.mxu0 0.0
    %108 = vmatpush1.msra.mxu0 0.0
    %109 = vmatprep.subr.mxu0 0.0
    %110 = vmatpush1.msra.mxu0 0.0
    %111 = vmatprep.subr.mxu0 0.0
    %112 = vmatpush1.msra.mxu0 0.0
    %113 = vmatprep.subr.mxu0 0.0
    %114 = vmatpush1.msra.mxu0 0.0
    %115 = vmatprep.subr.mxu0 0.0
    %116 = vmatpush1.msra.mxu0 0.0
    %117 = vmatprep.subr.mxu0 0.0
    %118 = vmatpush1.msra.mxu0 0.0
    %119 = vmatprep.subr.mxu0 0.0
    %120 = vmatpush1.msra.mxu0 0.0
    %121 = vmatprep.subr.mxu0 0.0
    %122 = vmatpush1.msra.mxu0 0.0
    %123 = vmatprep.subr.mxu0 0.0
    %124 = vmatpush1.msra.mxu0 0.0
    %125 = vmatprep.subr.mxu0 0.0
    %126 = vmatpush1.msra.mxu0 0.0
    %127 = vmatprep.subr.mxu0 0.0
    %128 = vmatpush1.msra.mxu0 0.0
    %129 = vmatprep.subr.mxu0 0.0
    %130 = vmatpush1.msra.mxu0 0.0
    %131 = vmatprep.subr.mxu0 0.0
    %132 = vmatpush1.msra.mxu0 0.0
    %133 = vmatprep.subr.mxu0 0.0
    %134 = vmatpush1.msra.mxu0 0.0
    %135 = vmatprep.subr.mxu0 0.0
    %136 = vmatpush1.msra.mxu0 0.0
    %137 = vmatprep.subr.mxu0 0.0
    %138 = vmatpush1.msra.mxu0 0.0
    %139 = vmatprep.subr.mxu0 0.0
    %140 = vmatpush1.msra.mxu0 0.0
    %141 = vmatprep.subr.mxu0 0.0
    %142 = vmatpush1.msra.mxu0 0.0
    %143 = vmatprep.subr.mxu0 0.0
    %144 = vmatpush1.msra.mxu0 0.0
    %145 = vmatprep.subr.mxu0 0.0
    %146 = vmatpush1.msra.mxu0 0.0
    %147 = vmatprep.subr.mxu0 0.0
    %148 = vmatpush1.msra.mxu0 0.0
    %149 = vmatprep.subr.mxu0 0.0
    %150 = vmatpush1.msra.mxu0 0.0
    %151 = vmatprep.mubr.f32.mxu0 0.0
    %152 = vmatmul.mubr.f32.gmra.mrb[0].mxu0 %v82
    %v153 = vpop.f32.mrb[0].mxu0
    %v154 = vadd.f32 %v78, %v153
    %v155 = vpop.f32.mrb[0].mxu0
    %156 = vmatprep.mubr.f32.mxu0 0.0
    %157 = vmatmul.mubr.f32.gmra.mrb[0].mxu0 %v85
    %v158 = vpop.f32.mrb[0].mxu0
    %v159 = vadd.f32 %v78, %v158
    %v160 = vpop.f32.mrb[0].mxu0
    %161 = vdwg.mxu0
    %v163 = vlaneseq
    %v164 = vshrl.u32 %v163, 7
    %v165 = vsub.s32 0, %v164
    %v166 = vrot.slane %v73, %v165
    %vm168 = vcmask 261120
    %v170 = vsel %vm168, 0.0, 0
    %172 = vmatprep.subr.mxu0 0.0
    %173 = vmatpush1.msra.mxu0 %v68
    %174 = vmatprep.subr.mxu0 0.0
    %175 = vmatpush1.msra.mxu0 %v69
    %176 = vmatprep.subr.mxu0 0.0
    %177 = vmatpush1.msra.mxu0 %v70
    %178 = vmatprep.subr.mxu0 0.0
    %179 = vmatpush1.msra.mxu0 %v71
    %180 = vmatprep.subr.mxu0 0.0
    %181 = vmatpush1.msra.mxu0 0.0
    %182 = vmatprep.subr.mxu0 0.0
    %183 = vmatpush1.msra.mxu0 0.0
    %184 = vmatprep.subr.mxu0 0.0
    %185 = vmatpush1.msra.mxu0 0.0
    %186 = vmatprep.subr.mxu0 0.0
    %187 = vmatpush1.msra.mxu0 0.0
    %188 = vmatprep.subr.mxu0 0.0
    %189 = vmatpush1.msra.mxu0 0.0
    %190 = vmatprep.subr.mxu0 0.0
    %191 = vmatpush1.msra.mxu0 0.0
    %192 = vmatprep.subr.mxu0 0.0
    %193 = vmatpush1.msra.mxu0 0.0
    %194 = vmatprep.subr.mxu0 0.0
    %195 = vmatpush1.msra.mxu0 0.0
    %196 = vmatprep.subr.mxu0 0.0
    %197 = vmatpush1.msra.mxu0 0.0
    %198 = vmatprep.subr.mxu0 0.0
    %199 = vmatpush1.msra.mxu0 0.0
    %200 = vmatprep.subr.mxu0 0.0
    %201 = vmatpush1.msra.mxu0 0.0
    %202 = vmatprep.subr.mxu0 0.0
    %203 = vmatpush1.msra.mxu0 0.0
    %204 = vmatprep.subr.mxu0 0.0
    %205 = vmatpush1.msra.mxu0 0.0
    %206 = vmatprep.subr.mxu0 0.0
    %207 = vmatpush1.msra.mxu0 0.0
    %208 = vmatprep.subr.mxu0 0.0
    %209 = vmatpush1.msra.mxu0 0.0
    %210 = vmatprep.subr.mxu0 0.0
    %211 = vmatpush1.msra.mxu0 0.0
    %212 = vmatprep.subr.mxu0 0.0
    %213 = vmatpush1.msra.mxu0 0.0
    %214 = vmatprep.subr.mxu0 0.0
    %215 = vmatpush1.msra.mxu0 0.0
    %216 = vmatprep.subr.mxu0 0.0
    %217 = vmatpush1.msra.mxu0 0.0
    %218 = vmatprep.subr.mxu0 0.0
    %219 = vmatpush1.msra.mxu0 0.0
    %220 = vmatprep.subr.mxu0 0.0
    %221 = vmatpush1.msra.mxu0 0.0
    %222 = vmatprep.subr.mxu0 0.0
    %223 = vmatpush1.msra.mxu0 0.0
    %224 = vmatprep.subr.mxu0 0.0
    %225 = vmatpush1.msra.mxu0 0.0
    %226 = vmatprep.subr.mxu0 0.0
    %227 = vmatpush1.msra.mxu0 0.0
    %228 = vmatprep.subr.mxu0 0.0
    %229 = vmatpush1.msra.mxu0 0.0
    %230 = vmatprep.subr.mxu0 0.0
    %231 = vmatpush1.msra.mxu0 0.0
    %232 = vmatprep.subr.mxu0 0.0
    %233 = vmatpush1.msra.mxu0 0.0
    %234 = vmatprep.subr.mxu0 0.0
    %235 = vmatpush1.msra.mxu0 0.0
    %236 = vmatprep.mubr.f32.mxu0 0.0
    %237 = vmatmul.mubr.f32.gmra.mrb[0].mxu0 %v170
    %v238 = vpop.f32.mrb[0].mxu0
    %v239 = vadd.f32 %v166, %v238
    %v240 = vpop.f32.mrb[0].mxu0
    %241 = vdwg.mxu0
    %v242 = vadd.f32 %v154, %v239
    %v243 = vxor.u32 %v242, 2147483648
    %v244 = vmul.f32 %v243, 1.442695
    %v245 = vpow.pop %v244
    %v246 = vadd.f32 %v245, 1.0
    %v247 = vrcp.pop %v246
    %v248 = vmul.f32 1.0, %v247
    %250 = vrot.lane.b32.xlu0 %v239, 64
    %v251 = vpop.permute.xlu0 %250
    %v253 = vmul.f32 %v248, %v251
    %255 = vrot.lane.b32.xlu0 %v253, 64
    %v256 = vpop.permute.xlu0 %255
    %v258 = vadd.f32 %v154, %v256
    %v259 = vtanh.pop %v258
    %v260 = vsub.f32 1.0, %v248
    %262 = vrot.lane.b32.xlu0 %v259, 96
    %v263 = vpop.permute.xlu0 %262
    %v265 = vmul.f32 %v260, %v263
    %v266 = vmul.f32 %v248, 0.0
    %v267 = vadd.f32 %v265, %v266
    %269 = vrot.lane.b32.xlu0 %v267, 96
    %v270 = vpop.permute.xlu0 %269
    %vm272 = vcmask 254976
    %273 = vst.msk [vmem:[#allocation2] sm:$0x3] %vm272, %v270
    %v274 = vsel %vm168, %v270, 0
    %276 = vmatprep.subr.mxu0 0.0
    %277 = vmatpush1.msra.mxu0 %v68
    %278 = vmatprep.subr.mxu0 0.0
    %279 = vmatpush1.msra.mxu0 %v69
    %280 = vmatprep.subr.mxu0 0.0
    %281 = vmatpush1.msra.mxu0 %v70
    %282 = vmatprep.subr.mxu0 0.0
    %283 = vmatpush1.msra.mxu0 %v71
    %284 = vmatprep.subr.mxu0 0.0
    %285 = vmatpush1.msra.mxu0 0.0
    %286 = vmatprep.subr.mxu0 0.0
    %287 = vmatpush1.msra.mxu0 0.0
    %288 = vmatprep.subr.mxu0 0.0
    %289 = vmatpush1.msra.mxu0 0.0
    %290 = vmatprep.subr.mxu0 0.0
    %291 = vmatpush1.msra.mxu0 0.0
    %292 = vmatprep.subr.mxu0 0.0
    %293 = vmatpush1.msra.mxu0 0.0
    %294 = vmatprep.subr.mxu0 0.0
    %295 = vmatpush1.msra.mxu0 0.0
    %296 = vmatprep.subr.mxu0 0.0
    %297 = vmatpush1.msra.mxu0 0.0
    %298 = vmatprep.subr.mxu0 0.0
    %299 = vmatpush1.msra.mxu0 0.0
    %300 = vmatprep.subr.mxu0 0.0
    %301 = vmatpush1.msra.mxu0 0.0
    %302 = vmatprep.subr.mxu0 0.0
    %303 = vmatpush1.msra.mxu0 0.0
    %304 = vmatprep.subr.mxu0 0.0
    %305 = vmatpush1.msra.mxu0 0.0
    %306 = vmatprep.subr.mxu0 0.0
    %307 = vmatpush1.msra.mxu0 0.0
    %308 = vmatprep.subr.mxu0 0.0
    %309 = vmatpush1.msra.mxu0 0.0
    %310 = vmatprep.subr.mxu0 0.0
    %311 = vmatpush1.msra.mxu0 0.0
    %312 = vmatprep.subr.mxu0 0.0
    %313 = vmatpush1.msra.mxu0 0.0
    %314 = vmatprep.subr.mxu0 0.0
    %315 = vmatpush1.msra.mxu0 0.0
    %316 = vmatprep.subr.mxu0 0.0
    %317 = vmatpush1.msra.mxu0 0.0
    %318 = vmatprep.subr.mxu0 0.0
    %319 = vmatpush1.msra.mxu0 0.0
    %320 = vmatprep.subr.mxu0 0.0
    %321 = vmatpush1.msra.mxu0 0.0
    %322 = vmatprep.subr.mxu0 0.0
    %323 = vmatpush1.msra.mxu0 0.0
    %324 = vmatprep.subr.mxu0 0.0
    %325 = vmatpush1.msra.mxu0 0.0
    %326 = vmatprep.subr.mxu0 0.0
    %327 = vmatpush1.msra.mxu0 0.0
    %328 = vmatprep.subr.mxu0 0.0
    %329 = vmatpush1.msra.mxu0 0.0
    %330 = vmatprep.subr.mxu0 0.0
    %331 = vmatpush1.msra.mxu0 0.0
    %332 = vmatprep.subr.mxu0 0.0
    %333 = vmatpush1.msra.mxu0 0.0
    %334 = vmatprep.subr.mxu0 0.0
    %335 = vmatpush1.msra.mxu0 0.0
    %336 = vmatprep.subr.mxu0 0.0
    %337 = vmatpush1.msra.mxu0 0.0
    %338 = vmatprep.subr.mxu0 0.0
    %339 = vmatpush1.msra.mxu0 0.0
    %340 = vmatprep.mubr.f32.mxu0 0.0
    %341 = vmatmul.mubr.f32.gmra.mrb[0].mxu0 %v274
    %v342 = vpop.f32.mrb[0].mxu0
    %v343 = vadd.f32 %v166, %v342
    %v344 = vpop.f32.mrb[0].mxu0
    %345 = vdwg.mxu0
    %v347 = vrot.slane %v343, 6
    %v349 = vadd.f32 %v154, %v347
    %v350 = vxor.u32 %v349, 2147483648
    %v351 = vmul.f32 %v350, 1.442695
    %v352 = vpow.pop %v351
    %v353 = vadd.f32 %v352, 1.0
    %v354 = vrcp.pop %v353
    %v355 = vmul.f32 1.0, %v354
    %356 = vrot.lane.b32.xlu0 %v347, 64
    %v357 = vpop.permute.xlu0 %356
    %v359 = vmul.f32 %v355, %v357
    %361 = vrot.lane.b32.xlu0 %v359, 64
    %v362 = vpop.permute.xlu0 %361
    %v364 = vadd.f32 %v154, %v362
    %v365 = vtanh.pop %v364
    %v366 = vsub.f32 1.0, %v355
    %368 = vrot.lane.b32.xlu0 %v365, 96
    %v369 = vpop.permute.xlu0 %368
    %v371 = vmul.f32 %v366, %v369
    %v372 = vrot.slane %v267, 6
    %v374 = vmul.f32 %v355, %v372
    %v375 = vadd.f32 %v371, %v374
    %377 = vrot.lane.b32.xlu0 %v375, 96
    %v378 = vpop.permute.xlu0 %377
    %vm380 = vcmask 257026
    %381 = vst.msk [vmem:[#allocation2] sm:$0xc] %vm380, %v378
    %v382 = vrot.slane %v375, 2
    %383 = vrot.lane.b32.xlu0 %v382, 96
    %v384 = vpop.permute.xlu0 %383
    %v385 = vsel %vm168, %v384, 0
    %387 = vmatprep.subr.mxu0 0.0
    %388 = vmatpush1.msra.mxu0 %v68
    %389 = vmatprep.subr.mxu0 0.0
    %390 = vmatpush1.msra.mxu0 %v69
    %391 = vmatprep.subr.mxu0 0.0
    %392 = vmatpush1.msra.mxu0 %v70
    %393 = vmatprep.subr.mxu0 0.0
    %394 = vmatpush1.msra.mxu0 %v71
    %395 = vmatprep.subr.mxu0 0.0
    %396 = vmatpush1.msra.mxu0 0.0
    %397 = vmatprep.subr.mxu0 0.0
    %398 = vmatpush1.msra.mxu0 0.0
    %399 = vmatprep.subr.mxu0 0.0
    %400 = vmatpush1.msra.mxu0 0.0
    %401 = vmatprep.subr.mxu0 0.0
    %402 = vmatpush1.msra.mxu0 0.0
    %403 = vmatprep.subr.mxu0 0.0
    %404 = vmatpush1.msra.mxu0 0.0
    %405 = vmatprep.subr.mxu0 0.0
    %406 = vmatpush1.msra.mxu0 0.0
    %407 = vmatprep.subr.mxu0 0.0
    %408 = vmatpush1.msra.mxu0 0.0
    %409 = vmatprep.subr.mxu0 0.0
    %410 = vmatpush1.msra.mxu0 0.0
    %411 = vmatprep.subr.mxu0 0.0
    %412 = vmatpush1.msra.mxu0 0.0
    %413 = vmatprep.subr.mxu0 0.0
    %414 = vmatpush1.msra.mxu0 0.0
    %415 = vmatprep.subr.mxu0 0.0
    %416 = vmatpush1.msra.mxu0 0.0
    %417 = vmatprep.subr.mxu0 0.0
    %418 = vmatpush1.msra.mxu0 0.0
    %419 = vmatprep.subr.mxu0 0.0
    %420 = vmatpush1.msra.mxu0 0.0
    %421 = vmatprep.subr.mxu0 0.0
    %422 = vmatpush1.msra.mxu0 0.0
    %423 = vmatprep.subr.mxu0 0.0
    %424 = vmatpush1.msra.mxu0 0.0
    %425 = vmatprep.subr.mxu0 0.0
    %426 = vmatpush1.msra.mxu0 0.0
    %427 = vmatprep.subr.mxu0 0.0
    %428 = vmatpush1.msra.mxu0 0.0
    %429 = vmatprep.subr.mxu0 0.0
    %430 = vmatpush1.msra.mxu0 0.0
    %431 = vmatprep.subr.mxu0 0.0
    %432 = vmatpush1.msra.mxu0 0.0
    %433 = vmatprep.subr.mxu0 0.0
    %434 = vmatpush1.msra.mxu0 0.0
    %435 = vmatprep.subr.mxu0 0.0
    %436 = vmatpush1.msra.mxu0 0.0
    %437 = vmatprep.subr.mxu0 0.0
    %438 = vmatpush1.msra.mxu0 0.0
    %439 = vmatprep.subr.mxu0 0.0
    %440 = vmatpush1.msra.mxu0 0.0
    %441 = vmatprep.subr.mxu0 0.0
    %442 = vmatpush1.msra.mxu0 0.0
    %443 = vmatprep.subr.mxu0 0.0
    %444 = vmatpush1.msra.mxu0 0.0
    %445 = vmatprep.subr.mxu0 0.0
    %446 = vmatpush1.msra.mxu0 0.0
    %447 = vmatprep.subr.mxu0 0.0
    %448 = vmatpush1.msra.mxu0 0.0
    %449 = vmatprep.subr.mxu0 0.0
    %450 = vmatpush1.msra.mxu0 0.0
    %451 = vmatprep.mubr.f32.mxu0 0.0
    %452 = vmatmul.mubr.f32.gmra.mrb[0].mxu0 %v385
    %v453 = vpop.f32.mrb[0].mxu0
    %v454 = vadd.f32 %v166, %v453
    %v455 = vpop.f32.mrb[0].mxu0
    %456 = vdwg.mxu0
    %v458 = vrot.slane %v454, 4
    %v460 = vadd.f32 %v154, %v458
    %v461 = vxor.u32 %v460, 2147483648
    %v462 = vmul.f32 %v461, 1.442695
    %v463 = vpow.pop %v462
    %v464 = vadd.f32 %v463, 1.0
    %v465 = vrcp.pop %v464
    %v466 = vmul.f32 1.0, %v465
    %467 = vrot.lane.b32.xlu0 %v458, 64
    %v468 = vpop.permute.xlu0 %467
    %v470 = vmul.f32 %v466, %v468
    %472 = vrot.lane.b32.xlu0 %v470, 64
    %v473 = vpop.permute.xlu0 %472
    %v475 = vadd.f32 %v154, %v473
    %v476 = vtanh.pop %v475
    %v477 = vsub.f32 1.0, %v466
    %479 = vrot.lane.b32.xlu0 %v476, 96
    %v480 = vpop.permute.xlu0 %479
    %v482 = vmul.f32 %v477, %v480
    %v483 = vrot.slane %v375, 6
    %v485 = vmul.f32 %v466, %v483
    %v486 = vadd.f32 %v482, %v485
    %488 = vrot.lane.b32.xlu0 %v486, 96
    %v489 = vpop.permute.xlu0 %488
    %vm491 = vcmask 259076
    %492 = vst.msk [vmem:[#allocation2] sm:$0x30] %vm491, %v489
    %v493 = vrot.slane %v486, 4
    %494 = vrot.lane.b32.xlu0 %v493, 96
    %v495 = vpop.permute.xlu0 %494
    %v496 = vsel %vm168, %v495, 0
    %498 = vmatprep.subr.mxu0 0.0
    %499 = vmatpush1.msra.mxu0 %v68
    %500 = vmatprep.subr.mxu0 0.0
    %501 = vmatpush1.msra.mxu0 %v69
    %502 = vmatprep.subr.mxu0 0.0
    %503 = vmatpush1.msra.mxu0 %v70
    %504 = vmatprep.subr.mxu0 0.0
    %505 = vmatpush1.msra.mxu0 %v71
    %506 = vmatprep.subr.mxu0 0.0
    %507 = vmatpush1.msra.mxu0 0.0
    %508 = vmatprep.subr.mxu0 0.0
    %509 = vmatpush1.msra.mxu0 0.0
    %510 = vmatprep.subr.mxu0 0.0
    %511 = vmatpush1.msra.mxu0 0.0
    %512 = vmatprep.subr.mxu0 0.0
    %513 = vmatpush1.msra.mxu0 0.0
    %514 = vmatprep.subr.mxu0 0.0
    %515 = vmatpush1.msra.mxu0 0.0
    %516 = vmatprep.subr.mxu0 0.0
    %517 = vmatpush1.msra.mxu0 0.0
    %518 = vmatprep.subr.mxu0 0.0
    %519 = vmatpush1.msra.mxu0 0.0
    %520 = vmatprep.subr.mxu0 0.0
    %521 = vmatpush1.msra.mxu0 0.0
    %522 = vmatprep.subr.mxu0 0.0
    %523 = vmatpush1.msra.mxu0 0.0
    %524 = vmatprep.subr.mxu0 0.0
    %525 = vmatpush1.msra.mxu0 0.0
    %526 = vmatprep.subr.mxu0 0.0
    %527 = vmatpush1.msra.mxu0 0.0
    %528 = vmatprep.subr.mxu0 0.0
    %529 = vmatpush1.msra.mxu0 0.0
    %530 = vmatprep.subr.mxu0 0.0
    %531 = vmatpush1.msra.mxu0 0.0
    %532 = vmatprep.subr.mxu0 0.0
    %533 = vmatpush1.msra.mxu0 0.0
    %534 = vmatprep.subr.mxu0 0.0
    %535 = vmatpush1.msra.mxu0 0.0
    %536 = vmatprep.subr.mxu0 0.0
    %537 = vmatpush1.msra.mxu0 0.0
    %538 = vmatprep.subr.mxu0 0.0
    %539 = vmatpush1.msra.mxu0 0.0
    %540 = vmatprep.subr.mxu0 0.0
    %541 = vmatpush1.msra.mxu0 0.0
    %542 = vmatprep.subr.mxu0 0.0
    %543 = vmatpush1.msra.mxu0 0.0
    %544 = vmatprep.subr.mxu0 0.0
    %545 = vmatpush1.msra.mxu0 0.0
    %546 = vmatprep.subr.mxu0 0.0
    %547 = vmatpush1.msra.mxu0 0.0
    %548 = vmatprep.subr.mxu0 0.0
    %549 = vmatpush1.msra.mxu0 0.0
    %550 = vmatprep.subr.mxu0 0.0
    %551 = vmatpush1.msra.mxu0 0.0
    %552 = vmatprep.subr.mxu0 0.0
    %553 = vmatpush1.msra.mxu0 0.0
    %554 = vmatprep.subr.mxu0 0.0
    %555 = vmatpush1.msra.mxu0 0.0
    %556 = vmatprep.subr.mxu0 0.0
    %557 = vmatpush1.msra.mxu0 0.0
    %558 = vmatprep.subr.mxu0 0.0
    %559 = vmatpush1.msra.mxu0 0.0
    %560 = vmatprep.subr.mxu0 0.0
    %561 = vmatpush1.msra.mxu0 0.0
    %562 = vmatprep.mubr.f32.mxu0 0.0
    %563 = vmatmul.mubr.f32.gmra.mrb[0].mxu0 %v496
    %v564 = vpop.f32.mrb[0].mxu0
    %v565 = vadd.f32 %v166, %v564
    %v566 = vpop.f32.mrb[0].mxu0
    %567 = vdwg.mxu0
    %v569 = vrot.slane %v565, 2
    %v571 = vadd.f32 %v154, %v569
    %v572 = vxor.u32 %v571, 2147483648
    %v573 = vmul.f32 %v572, 1.442695
    %v574 = vpow.pop %v573
    %v575 = vadd.f32 %v574, 1.0
    %v576 = vrcp.pop %v575
    %v577 = vmul.f32 1.0, %v576
    %578 = vrot.lane.b32.xlu0 %v569, 64
    %v579 = vpop.permute.xlu0 %578
    %v581 = vmul.f32 %v577, %v579
    %583 = vrot.lane.b32.xlu0 %v581, 64
    %v584 = vpop.permute.xlu0 %583
    %v586 = vadd.f32 %v154, %v584
    %v587 = vtanh.pop %v586
    %v588 = vsub.f32 1.0, %v577
    %590 = vrot.lane.b32.xlu0 %v587, 96
    %v591 = vpop.permute.xlu0 %590
    %v593 = vmul.f32 %v588, %v591
    %v594 = vrot.slane %v486, 6
    %v596 = vmul.f32 %v577, %v594
    %v597 = vadd.f32 %v593, %v596
    %599 = vrot.lane.b32.xlu0 %v597, 96
    %v600 = vpop.permute.xlu0 %599
    %vm602 = vcmask 261126
    %603 = vst.msk [vmem:[#allocation2] sm:$0xc0] %vm602, %v600
    %v604 = vrot.slane %v597, 6
    %605 = vrot.lane.b32.xlu0 %v604, 96
    %v606 = vpop.permute.xlu0 %605
    %v607 = vsel %vm168, %v606, 0
    %609 = vmatprep.subr.mxu0 0.0
    %610 = vmatpush1.msra.mxu0 %v68
    %611 = vmatprep.subr.mxu0 0.0
    %612 = vmatpush1.msra.mxu0 %v69
    %613 = vmatprep.subr.mxu0 0.0
    %614 = vmatpush1.msra.mxu0 %v70
    %615 = vmatprep.subr.mxu0 0.0
    %616 = vmatpush1.msra.mxu0 %v71
    %617 = vmatprep.subr.mxu0 0.0
    %618 = vmatpush1.msra.mxu0 0.0
    %619 = vmatprep.subr.mxu0 0.0
    %620 = vmatpush1.msra.mxu0 0.0
    %621 = vmatprep.subr.mxu0 0.0
    %622 = vmatpush1.msra.mxu0 0.0
    %623 = vmatprep.subr.mxu0 0.0
    %624 = vmatpush1.msra.mxu0 0.0
    %625 = vmatprep.subr.mxu0 0.0
    %626 = vmatpush1.msra.mxu0 0.0
    %627 = vmatprep.subr.mxu0 0.0
    %628 = vmatpush1.msra.mxu0 0.0
    %629 = vmatprep.subr.mxu0 0.0
    %630 = vmatpush1.msra.mxu0 0.0
    %631 = vmatprep.subr.mxu0 0.0
    %632 = vmatpush1.msra.mxu0 0.0
    %633 = vmatprep.subr.mxu0 0.0
    %634 = vmatpush1.msra.mxu0 0.0
    %635 = vmatprep.subr.mxu0 0.0
    %636 = vmatpush1.msra.mxu0 0.0
    %637 = vmatprep.subr.mxu0 0.0
    %638 = vmatpush1.msra.mxu0 0.0
    %639 = vmatprep.subr.mxu0 0.0
    %640 = vmatpush1.msra.mxu0 0.0
    %641 = vmatprep.subr.mxu0 0.0
    %642 = vmatpush1.msra.mxu0 0.0
    %643 = vmatprep.subr.mxu0 0.0
    %644 = vmatpush1.msra.mxu0 0.0
    %645 = vmatprep.subr.mxu0 0.0
    %646 = vmatpush1.msra.mxu0 0.0
    %647 = vmatprep.subr.mxu0 0.0
    %648 = vmatpush1.msra.mxu0 0.0
    %649 = vmatprep.subr.mxu0 0.0
    %650 = vmatpush1.msra.mxu0 0.0
    %651 = vmatprep.subr.mxu0 0.0
    %652 = vmatpush1.msra.mxu0 0.0
    %653 = vmatprep.subr.mxu0 0.0
    %654 = vmatpush1.msra.mxu0 0.0
    %655 = vmatprep.subr.mxu0 0.0
    %656 = vmatpush1.msra.mxu0 0.0
    %657 = vmatprep.subr.mxu0 0.0
    %658 = vmatpush1.msra.mxu0 0.0
    %659 = vmatprep.subr.mxu0 0.0
    %660 = vmatpush1.msra.mxu0 0.0
    %661 = vmatprep.subr.mxu0 0.0
    %662 = vmatpush1.msra.mxu0 0.0
    %663 = vmatprep.subr.mxu0 0.0
    %664 = vmatpush1.msra.mxu0 0.0
    %665 = vmatprep.subr.mxu0 0.0
    %666 = vmatpush1.msra.mxu0 0.0
    %667 = vmatprep.subr.mxu0 0.0
    %668 = vmatpush1.msra.mxu0 0.0
    %669 = vmatprep.subr.mxu0 0.0
    %670 = vmatpush1.msra.mxu0 0.0
    %671 = vmatprep.subr.mxu0 0.0
    %672 = vmatpush1.msra.mxu0 0.0
    %673 = vmatprep.mubr.f32.mxu0 0.0
    %674 = vmatmul.mubr.f32.gmra.mrb[0].mxu0 %v607
    %v675 = vpop.f32.mrb[0].mxu0
    %v676 = vadd.f32 %v166, %v675
    %v677 = vpop.f32.mrb[0].mxu0
    %678 = vdwg.mxu0
    %v679 = vadd.f32 %v159, %v676
    %v680 = vxor.u32 %v679, 2147483648
    %v681 = vmul.f32 %v680, 1.442695
    %v682 = vpow.pop %v681
    %v683 = vadd.f32 %v682, 1.0
    %v684 = vrcp.pop %v683
    %v685 = vmul.f32 1.0, %v684
    %687 = vrot.lane.b32.xlu0 %v676, 64
    %v688 = vpop.permute.xlu0 %687
    %v690 = vmul.f32 %v685, %v688
    %692 = vrot.lane.b32.xlu0 %v690, 64
    %v693 = vpop.permute.xlu0 %692
    %v695 = vadd.f32 %v159, %v693
    %v696 = vtanh.pop %v695
    %v697 = vsub.f32 1.0, %v685
    %699 = vrot.lane.b32.xlu0 %v696, 96
    %v700 = vpop.permute.xlu0 %699
    %v702 = vmul.f32 %v697, %v700
    %v704 = vmul.f32 %v685, %v604
    %v705 = vadd.f32 %v702, %v704
    %707 = vrot.lane.b32.xlu0 %v705, 96
    %v708 = vpop.permute.xlu0 %707
    %710 = vst.msk [vmem:[#allocation2 + $0x8] sm:$0x3] %vm272, %v708
    %v711 = vsel %vm168, %v708, 0
    %713 = vmatprep.subr.mxu0 0.0
    %714 = vmatpush1.msra.mxu0 %v68
    %715 = vmatprep.subr.mxu0 0.0
    %716 = vmatpush1.msra.mxu0 %v69
    %717 = vmatprep.subr.mxu0 0.0
    %718 = vmatpush1.msra.mxu0 %v70
    %719 = vmatprep.subr.mxu0 0.0
    %720 = vmatpush1.msra.mxu0 %v71
    %721 = vmatprep.subr.mxu0 0.0
    %722 = vmatpush1.msra.mxu0 0.0
    %723 = vmatprep.subr.mxu0 0.0
    %724 = vmatpush1.msra.mxu0 0.0
    %725 = vmatprep.subr.mxu0 0.0
    %726 = vmatpush1.msra.mxu0 0.0
    %727 = vmatprep.subr.mxu0 0.0
    %728 = vmatpush1.msra.mxu0 0.0
    %729 = vmatprep.subr.mxu0 0.0
    %730 = vmatpush1.msra.mxu0 0.0
    %731 = vmatprep.subr.mxu0 0.0
    %732 = vmatpush1.msra.mxu0 0.0
    %733 = vmatprep.subr.mxu0 0.0
    %734 = vmatpush1.msra.mxu0 0.0
    %735 = vmatprep.subr.mxu0 0.0
    %736 = vmatpush1.msra.mxu0 0.0
    %737 = vmatprep.subr.mxu0 0.0
    %738 = vmatpush1.msra.mxu0 0.0
    %739 = vmatprep.subr.mxu0 0.0
    %740 = vmatpush1.msra.mxu0 0.0
    %741 = vmatprep.subr.mxu0 0.0
    %742 = vmatpush1.msra.mxu0 0.0
    %743 = vmatprep.subr.mxu0 0.0
    %744 = vmatpush1.msra.mxu0 0.0
    %745 = vmatprep.subr.mxu0 0.0
    %746 = vmatpush1.msra.mxu0 0.0
    %747 = vmatprep.subr.mxu0 0.0
    %748 = vmatpush1.msra.mxu0 0.0
    %749 = vmatprep.subr.mxu0 0.0
    %750 = vmatpush1.msra.mxu0 0.0
    %751 = vmatprep.subr.mxu0 0.0
    %752 = vmatpush1.msra.mxu0 0.0
    %753 = vmatprep.subr.mxu0 0.0
    %754 = vmatpush1.msra.mxu0 0.0
    %755 = vmatprep.subr.mxu0 0.0
    %756 = vmatpush1.msra.mxu0 0.0
    %757 = vmatprep.subr.mxu0 0.0
    %758 = vmatpush1.msra.mxu0 0.0
    %759 = vmatprep.subr.mxu0 0.0
    %760 = vmatpush1.msra.mxu0 0.0
    %761 = vmatprep.subr.mxu0 0.0
    %762 = vmatpush1.msra.mxu0 0.0
    %763 = vmatprep.subr.mxu0 0.0
    %764 = vmatpush1.msra.mxu0 0.0
    %765 = vmatprep.subr.mxu0 0.0
    %766 = vmatpush1.msra.mxu0 0.0
    %767 = vmatprep.subr.mxu0 0.0
    %768 = vmatpush1.msra.mxu0 0.0
    %769 = vmatprep.subr.mxu0 0.0
    %770 = vmatpush1.msra.mxu0 0.0
    %771 = vmatprep.subr.mxu0 0.0
    %772 = vmatpush1.msra.mxu0 0.0
    %773 = vmatprep.subr.mxu0 0.0
    %774 = vmatpush1.msra.mxu0 0.0
    %775 = vmatprep.subr.mxu0 0.0
    %776 = vmatpush1.msra.mxu0 0.0
    %777 = vmatprep.mubr.f32.mxu0 0.0
    %778 = vmatmul.mubr.f32.gmra.mrb[0].mxu0 %v711
    %v779 = vpop.f32.mrb[0].mxu0
    %v780 = vadd.f32 %v166, %v779
    %v781 = vpop.f32.mrb[0].mxu0
    %782 = vdwg.mxu0
    %v784 = vrot.slane %v780, 6
    %v786 = vadd.f32 %v159, %v784
    %v787 = vxor.u32 %v786, 2147483648
    %v788 = vmul.f32 %v787, 1.442695
    %v789 = vpow.pop %v788
    %v790 = vadd.f32 %v789, 1.0
    %v791 = vrcp.pop %v790
    %v792 = vmul.f32 1.0, %v791
    %793 = vrot.lane.b32.xlu0 %v784, 64
    %v794 = vpop.permute.xlu0 %793
    %v796 = vmul.f32 %v792, %v794
    %798 = vrot.lane.b32.xlu0 %v796, 64
    %v799 = vpop.permute.xlu0 %798
    %v801 = vadd.f32 %v159, %v799
    %v802 = vtanh.pop %v801
    %v803 = vsub.f32 1.0, %v792
    %805 = vrot.lane.b32.xlu0 %v802, 96
    %v806 = vpop.permute.xlu0 %805
    %v808 = vmul.f32 %v803, %v806
    %v809 = vrot.slane %v705, 6
    %v811 = vmul.f32 %v792, %v809
    %v812 = vadd.f32 %v808, %v811
    %814 = vrot.lane.b32.xlu0 %v812, 96
    %v815 = vpop.permute.xlu0 %814
    %817 = vst.msk [vmem:[#allocation2 + $0x8] sm:$0xc] %vm380, %v815
    %v818 = vrot.slane %v812, 2
    %819 = vrot.lane.b32.xlu0 %v818, 96
    %v820 = vpop.permute.xlu0 %819
    %v821 = vsel %vm168, %v820, 0
    %823 = vmatprep.subr.mxu0 0.0
    %824 = vmatpush1.msra.mxu0 %v68
    %825 = vmatprep.subr.mxu0 0.0
    %826 = vmatpush1.msra.mxu0 %v69
    %827 = vmatprep.subr.mxu0 0.0
    %828 = vmatpush1.msra.mxu0 %v70
    %829 = vmatprep.subr.mxu0 0.0
    %830 = vmatpush1.msra.mxu0 %v71
    %831 = vmatprep.subr.mxu0 0.0
    %832 = vmatpush1.msra.mxu0 0.0
    %833 = vmatprep.subr.mxu0 0.0
    %834 = vmatpush1.msra.mxu0 0.0
    %835 = vmatprep.subr.mxu0 0.0
    %836 = vmatpush1.msra.mxu0 0.0
    %837 = vmatprep.subr.mxu0 0.0
    %838 = vmatpush1.msra.mxu0 0.0
    %839 = vmatprep.subr.mxu0 0.0
    %840 = vmatpush1.msra.mxu0 0.0
    %841 = vmatprep.subr.mxu0 0.0
    %842 = vmatpush1.msra.mxu0 0.0
    %843 = vmatprep.subr.mxu0 0.0
    %844 = vmatpush1.msra.mxu0 0.0
    %845 = vmatprep.subr.mxu0 0.0
    %846 = vmatpush1.msra.mxu0 0.0
    %847 = vmatprep.subr.mxu0 0.0
    %848 = vmatpush1.msra.mxu0 0.0
    %849 = vmatprep.subr.mxu0 0.0
    %850 = vmatpush1.msra.mxu0 0.0
    %851 = vmatprep.subr.mxu0 0.0
    %852 = vmatpush1.msra.mxu0 0.0
    %853 = vmatprep.subr.mxu0 0.0
    %854 = vmatpush1.msra.mxu0 0.0
    %855 = vmatprep.subr.mxu0 0.0
    %856 = vmatpush1.msra.mxu0 0.0
    %857 = vmatprep.subr.mxu0 0.0
    %858 = vmatpush1.msra.mxu0 0.0
    %859 = vmatprep.subr.mxu0 0.0
    %860 = vmatpush1.msra.mxu0 0.0
    %861 = vmatprep.subr.mxu0 0.0
    %862 = vmatpush1.msra.mxu0 0.0
    %863 = vmatprep.subr.mxu0 0.0
    %864 = vmatpush1.msra.mxu0 0.0
    %865 = vmatprep.subr.mxu0 0.0
    %866 = vmatpush1.msra.mxu0 0.0
    %867 = vmatprep.subr.mxu0 0.0
    %868 = vmatpush1.msra.mxu0 0.0
    %869 = vmatprep.subr.mxu0 0.0
    %870 = vmatpush1.msra.mxu0 0.0
    %871 = vmatprep.subr.mxu0 0.0
    %872 = vmatpush1.msra.mxu0 0.0
    %873 = vmatprep.subr.mxu0 0.0
    %874 = vmatpush1.msra.mxu0 0.0
    %875 = vmatprep.subr.mxu0 0.0
    %876 = vmatpush1.msra.mxu0 0.0
    %877 = vmatprep.subr.mxu0 0.0
    %878 = vmatpush1.msra.mxu0 0.0
    %879 = vmatprep.subr.mxu0 0.0
    %880 = vmatpush1.msra.mxu0 0.0
    %881 = vmatprep.subr.mxu0 0.0
    %882 = vmatpush1.msra.mxu0 0.0
    %883 = vmatprep.subr.mxu0 0.0
    %884 = vmatpush1.msra.mxu0 0.0
    %885 = vmatprep.subr.mxu0 0.0
    %886 = vmatpush1.msra.mxu0 0.0
    %887 = vmatprep.mubr.f32.mxu0 0.0
    %888 = vmatmul.mubr.f32.gmra.mrb[0].mxu0 %v821
    %v889 = vpop.f32.mrb[0].mxu0
    %v890 = vadd.f32 %v166, %v889
    %v891 = vpop.f32.mrb[0].mxu0
    %892 = vdwg.mxu0
    %v894 = vrot.slane %v890, 4
    %v896 = vadd.f32 %v159, %v894
    %v897 = vxor.u32 %v896, 2147483648
    %v898 = vmul.f32 %v897, 1.442695
    %v899 = vpow.pop %v898
    %v900 = vadd.f32 %v899, 1.0
    %v901 = vrcp.pop %v900
    %v902 = vmul.f32 1.0, %v901
    %903 = vrot.lane.b32.xlu0 %v894, 64
    %v904 = vpop.permute.xlu0 %903
    %v906 = vmul.f32 %v902, %v904
    %908 = vrot.lane.b32.xlu0 %v906, 64
    %v909 = vpop.permute.xlu0 %908
    %v911 = vadd.f32 %v159, %v909
    %v912 = vtanh.pop %v911
    %v913 = vsub.f32 1.0, %v902
    %915 = vrot.lane.b32.xlu0 %v912, 96
    %v916 = vpop.permute.xlu0 %915
    %v918 = vmul.f32 %v913, %v916
    %v919 = vrot.slane %v812, 6
    %v921 = vmul.f32 %v902, %v919
    %v922 = vadd.f32 %v918, %v921
    %924 = vrot.lane.b32.xlu0 %v922, 96
    %v925 = vpop.permute.xlu0 %924
    %927 = vst.msk [vmem:[#allocation2 + $0x8] sm:$0x30] %vm491, %v925
    %v928 = vrot.slane %v922, 4
    %929 = vrot.lane.b32.xlu0 %v928, 96
    %v930 = vpop.permute.xlu0 %929
    %v931 = vsel %vm168, %v930, 0
    %933 = vmatprep.subr.mxu0 0.0
    %934 = vmatpush1.msra.mxu0 %v68
    %935 = vmatprep.subr.mxu0 0.0
    %936 = vmatpush1.msra.mxu0 %v69
    %937 = vmatprep.subr.mxu0 0.0
    %938 = vmatpush1.msra.mxu0 %v70
    %939 = vmatprep.subr.mxu0 0.0
    %940 = vmatpush1.msra.mxu0 %v71
    %941 = vmatprep.subr.mxu0 0.0
    %942 = vmatpush1.msra.mxu0 0.0
    %943 = vmatprep.subr.mxu0 0.0
    %944 = vmatpush1.msra.mxu0 0.0
    %945 = vmatprep.subr.mxu0 0.0
    %946 = vmatpush1.msra.mxu0 0.0
    %947 = vmatprep.subr.mxu0 0.0
    %948 = vmatpush1.msra.mxu0 0.0
    %949 = vmatprep.subr.mxu0 0.0
    %950 = vmatpush1.msra.mxu0 0.0
    %951 = vmatprep.subr.mxu0 0.0
    %952 = vmatpush1.msra.mxu0 0.0
    %953 = vmatprep.subr.mxu0 0.0
    %954 = vmatpush1.msra.mxu0 0.0
    %955 = vmatprep.subr.mxu0 0.0
    %956 = vmatpush1.msra.mxu0 0.0
    %957 = vmatprep.subr.mxu0 0.0
    %958 = vmatpush1.msra.mxu0 0.0
    %959 = vmatprep.subr.mxu0 0.0
    %960 = vmatpush1.msra.mxu0 0.0
    %961 = vmatprep.subr.mxu0 0.0
    %962 = vmatpush1.msra.mxu0 0.0
    %963 = vmatprep.subr.mxu0 0.0
    %964 = vmatpush1.msra.mxu0 0.0
    %965 = vmatprep.subr.mxu0 0.0
    %966 = vmatpush1.msra.mxu0 0.0
    %967 = vmatprep.subr.mxu0 0.0
    %968 = vmatpush1.msra.mxu0 0.0
    %969 = vmatprep.subr.mxu0 0.0
    %970 = vmatpush1.msra.mxu0 0.0
    %971 = vmatprep.subr.mxu0 0.0
    %972 = vmatpush1.msra.mxu0 0.0
    %973 = vmatprep.subr.mxu0 0.0
    %974 = vmatpush1.msra.mxu0 0.0
    %975 = vmatprep.subr.mxu0 0.0
    %976 = vmatpush1.msra.mxu0 0.0
    %977 = vmatprep.subr.mxu0 0.0
    %978 = vmatpush1.msra.mxu0 0.0
    %979 = vmatprep.subr.mxu0 0.0
    %980 = vmatpush1.msra.mxu0 0.0
    %981 = vmatprep.subr.mxu0 0.0
    %982 = vmatpush1.msra.mxu0 0.0
    %983 = vmatprep.subr.mxu0 0.0
    %984 = vmatpush1.msra.mxu0 0.0
    %985 = vmatprep.subr.mxu0 0.0
    %986 = vmatpush1.msra.mxu0 0.0
    %987 = vmatprep.subr.mxu0 0.0
    %988 = vmatpush1.msra.mxu0 0.0
    %989 = vmatprep.subr.mxu0 0.0
    %990 = vmatpush1.msra.mxu0 0.0
    %991 = vmatprep.subr.mxu0 0.0
    %992 = vmatpush1.msra.mxu0 0.0
    %993 = vmatprep.subr.mxu0 0.0
    %994 = vmatpush1.msra.mxu0 0.0
    %995 = vmatprep.subr.mxu0 0.0
    %996 = vmatpush1.msra.mxu0 0.0
    %997 = vmatprep.mubr.f32.mxu0 0.0
    %998 = vmatmul.mubr.f32.gmra.mrb[0].mxu0 %v931
    %v999 = vpop.f32.mrb[0].mxu0
    %v1000 = vadd.f32 %v166, %v999
    %v1001 = vpop.f32.mrb[0].mxu0
    %1002 = vdwg.mxu0
    %v1004 = vrot.slane %v1000, 2
    %v1006 = vadd.f32 %v159, %v1004
    %v1007 = vxor.u32 %v1006, 2147483648
    %v1008 = vmul.f32 %v1007, 1.442695
    %v1009 = vpow.pop %v1008
    %v1010 = vadd.f32 %v1009, 1.0
    %v1011 = vrcp.pop %v1010
    %v1012 = vmul.f32 1.0, %v1011
    %1013 = vrot.lane.b32.xlu0 %v1004, 64
    %v1014 = vpop.permute.xlu0 %1013
    %v1016 = vmul.f32 %v1012, %v1014
    %1018 = vrot.lane.b32.xlu0 %v1016, 64
    %v1019 = vpop.permute.xlu0 %1018
    %v1021 = vadd.f32 %v159, %v1019
    %v1022 = vtanh.pop %v1021
    %v1023 = vsub.f32 1.0, %v1012
    %1025 = vrot.lane.b32.xlu0 %v1022, 96
    %v1026 = vpop.permute.xlu0 %1025
    %v1028 = vmul.f32 %v1023, %v1026
    %v1029 = vrot.slane %v922, 6
    %v1031 = vmul.f32 %v1012, %v1029
    %v1032 = vadd.f32 %v1028, %v1031
    %1034 = vrot.lane.b32.xlu0 %v1032, 96
    %v1035 = vpop.permute.xlu0 %1034
    %1037 = vst.msk [vmem:[#allocation2 + $0x8] sm:$0xc0] %vm602, %v1035
    %v1038 = vld [vmem:[#allocation2] sm:$0xff]
    %v1039 = vld [vmem:[#allocation2 + $0x8] sm:$0xff]
    %v1040 = vld [vmem:[%s5] sm:$0xff]
    %v1041 = vld [vmem:[%s5 + $0x8] sm:$0xff]
    %v1042 = vld [vmem:[%s5 + $0x10] sm:$0xff]
    %v1043 = vld [vmem:[%s5 + $0x18] sm:$0xff]
    %v1044 = vld [vmem:[#allocation6] sm:$0xff]
    %v1045 = vld [vmem:[#allocation6 + $0x8] sm:$0xff]
    %v1046 = vld [vmem:[#allocation6 + $0x10] sm:$0xff]
    %v1047 = vld [vmem:[#allocation6 + $0x18] sm:$0xff]
    %v1048 = vld [vmem:[%s7] sm:$0x1]
    %v1049 = vld [vmem:[%s8] sm:$0x1]
    %v1051 = vlaneseq
    %v1052 = vshrl.u32 %v1051, 7
    %v1053 = vsub.s32 0, %v1052
    %v1054 = vrot.slane %v1048, %v1053
    %v1057 = vsel %vm168, %v1038, 0
    %v1060 = vsel %vm168, %v1039, 0
    %1062 = vmatprep.subr.mxu0 0.0
    %1063 = vmatpush1.msra.mxu0 %v1040
    %1064 = vmatprep.subr.mxu0 0.0
    %1065 = vmatpush1.msra.mxu0 %v1041
    %1066 = vmatprep.subr.mxu0 0.0
    %1067 = vmatpush1.msra.mxu0 %v1042
    %1068 = vmatprep.subr.mxu0 0.0
    %1069 = vmatpush1.msra.mxu0 %v1043
    %1070 = vmatprep.subr.mxu0 0.0
    %1071 = vmatpush1.msra.mxu0 0.0
    %1072 = vmatprep.subr.mxu0 0.0
    %1073 = vmatpush1.msra.mxu0 0.0
    %1074 = vmatprep.subr.mxu0 0.0
    %1075 = vmatpush1.msra.mxu0 0.0
    %1076 = vmatprep.subr.mxu0 0.0
    %1077 = vmatpush1.msra.mxu0 0.0
    %1078 = vmatprep.subr.mxu0 0.0
    %1079 = vmatpush1.msra.mxu0 0.0
    %1080 = vmatprep.subr.mxu0 0.0
    %1081 = vmatpush1.msra.mxu0 0.0
    %1082 = vmatprep.subr.mxu0 0.0
    %1083 = vmatpush1.msra.mxu0 0.0
    %1084 = vmatprep.subr.mxu0 0.0
    %1085 = vmatpush1.msra.mxu0 0.0
    %1086 = vmatprep.subr.mxu0 0.0
    %1087 = vmatpush1.msra.mxu0 0.0
    %1088 = vmatprep.subr.mxu0 0.0
    %1089 = vmatpush1.msra.mxu0 0.0
    %1090 = vmatprep.subr.mxu0 0.0
    %1091 = vmatpush1.msra.mxu0 0.0
    %1092 = vmatprep.subr.mxu0 0.0
    %1093 = vmatpush1.msra.mxu0 0.0
    %1094 = vmatprep.subr.mxu0 0.0
    %1095 = vmatpush1.msra.mxu0 0.0
    %1096 = vmatprep.subr.mxu0 0.0
    %1097 = vmatpush1.msra.mxu0 0.0
    %1098 = vmatprep.subr.mxu0 0.0
    %1099 = vmatpush1.msra.mxu0 0.0
    %1100 = vmatprep.subr.mxu0 0.0
    %1101 = vmatpush1.msra.mxu0 0.0
    %1102 = vmatprep.subr.mxu0 0.0
    %1103 = vmatpush1.msra.mxu0 0.0
    %1104 = vmatprep.subr.mxu0 0.0
    %1105 = vmatpush1.msra.mxu0 0.0
    %1106 = vmatprep.subr.mxu0 0.0
    %1107 = vmatpush1.msra.mxu0 0.0
    %1108 = vmatprep.subr.mxu0 0.0
    %1109 = vmatpush1.msra.mxu0 0.0
    %1110 = vmatprep.subr.mxu0 0.0
    %1111 = vmatpush1.msra.mxu0 0.0
    %1112 = vmatprep.subr.mxu0 0.0
    %1113 = vmatpush1.msra.mxu0 0.0
    %1114 = vmatprep.subr.mxu0 0.0
    %1115 = vmatpush1.msra.mxu0 0.0
    %1116 = vmatprep.subr.mxu0 0.0
    %1117 = vmatpush1.msra.mxu0 0.0
    %1118 = vmatprep.subr.mxu0 0.0
    %1119 = vmatpush1.msra.mxu0 0.0
    %1120 = vmatprep.subr.mxu0 0.0
    %1121 = vmatpush1.msra.mxu0 0.0
    %1122 = vmatprep.subr.mxu0 0.0
    %1123 = vmatpush1.msra.mxu0 0.0
    %1124 = vmatprep.subr.mxu0 0.0
    %1125 = vmatpush1.msra.mxu0 0.0
    %1126 = vmatprep.mubr.f32.mxu0 0.0
    %1127 = vmatmul.mubr.f32.gmra.mrb[0].mxu0 %v1057
    %v1128 = vpop.f32.mrb[0].mxu0
    %v1129 = vadd.f32 %v1054, %v1128
    %v1130 = vpop.f32.mrb[0].mxu0
    %1131 = vmatprep.mubr.f32.mxu0 0.0
    %1132 = vmatmul.mubr.f32.gmra.mrb[0].mxu0 %v1060
    %v1133 = vpop.f32.mrb[0].mxu0
    %v1134 = vadd.f32 %v1054, %v1133
    %v1135 = vpop.f32.mrb[0].mxu0
    %1136 = vdwg.mxu0
    %v1138 = vlaneseq
    %v1139 = vshrl.u32 %v1138, 7
    %v1140 = vsub.s32 0, %v1139
    %v1141 = vrot.slane %v1049, %v1140
    %1143 = vmatprep.subr.mxu0 0.0
    %1144 = vmatpush1.msra.mxu0 %v1044
    %1145 = vmatprep.subr.mxu0 0.0
    %1146 = vmatpush1.msra.mxu0 %v1045
    %1147 = vmatprep.subr.mxu0 0.0
    %1148 = vmatpush1.msra.mxu0 %v1046
    %1149 = vmatprep.subr.mxu0 0.0
    %1150 = vmatpush1.msra.mxu0 %v1047
    %1151 = vmatprep.subr.mxu0 0.0
    %1152 = vmatpush1.msra.mxu0 0.0
    %1153 = vmatprep.subr.mxu0 0.0
    %1154 = vmatpush1.msra.mxu0 0.0
    %1155 = vmatprep.subr.mxu0 0.0
    %1156 = vmatpush1.msra.mxu0 0.0
    %1157 = vmatprep.subr.mxu0 0.0
    %1158 = vmatpush1.msra.mxu0 0.0
    %1159 = vmatprep.subr.mxu0 0.0
    %1160 = vmatpush1.msra.mxu0 0.0
    %1161 = vmatprep.subr.mxu0 0.0
    %1162 = vmatpush1.msra.mxu0 0.0
    %1163 = vmatprep.subr.mxu0 0.0
    %1164 = vmatpush1.msra.mxu0 0.0
    %1165 = vmatprep.subr.mxu0 0.0
    %1166 = vmatpush1.msra.mxu0 0.0
    %1167 = vmatprep.subr.mxu0 0.0
    %1168 = vmatpush1.msra.mxu0 0.0
    %1169 = vmatprep.subr.mxu0 0.0
    %1170 = vmatpush1.msra.mxu0 0.0
    %1171 = vmatprep.subr.mxu0 0.0
    %1172 = vmatpush1.msra.mxu0 0.0
    %1173 = vmatprep.subr.mxu0 0.0
    %1174 = vmatpush1.msra.mxu0 0.0
    %1175 = vmatprep.subr.mxu0 0.0
    %1176 = vmatpush1.msra.mxu0 0.0
    %1177 = vmatprep.subr.mxu0 0.0
    %1178 = vmatpush1.msra.mxu0 0.0
    %1179 = vmatprep.subr.mxu0 0.0
    %1180 = vmatpush1.msra.mxu0 0.0
    %1181 = vmatprep.subr.mxu0 0.0
    %1182 = vmatpush1.msra.mxu0 0.0
    %1183 = vmatprep.subr.mxu0 0.0
    %1184 = vmatpush1.msra.mxu0 0.0
    %1185 = vmatprep.subr.mxu0 0.0
    %1186 = vmatpush1.msra.mxu0 0.0
    %1187 = vmatprep.subr.mxu0 0.0
    %1188 = vmatpush1.msra.mxu0 0.0
    %1189 = vmatprep.subr.mxu0 0.0
    %1190 = vmatpush1.msra.mxu0 0.0
    %1191 = vmatprep.subr.mxu0 0.0
    %1192 = vmatpush1.msra.mxu0 0.0
    %1193 = vmatprep.subr.mxu0 0.0
    %1194 = vmatpush1.msra.mxu0 0.0
    %1195 = vmatprep.subr.mxu0 0.0
    %1196 = vmatpush1.msra.mxu0 0.0
    %1197 = vmatprep.subr.mxu0 0.0
    %1198 = vmatpush1.msra.mxu0 0.0
    %1199 = vmatprep.subr.mxu0 0.0
    %1200 = vmatpush1.msra.mxu0 0.0
    %1201 = vmatprep.subr.mxu0 0.0
    %1202 = vmatpush1.msra.mxu0 0.0
    %1203 = vmatprep.subr.mxu0 0.0
    %1204 = vmatpush1.msra.mxu0 0.0
    %1205 = vmatprep.subr.mxu0 0.0
    %1206 = vmatpush1.msra.mxu0 0.0
    %1207 = vmatprep.mubr.f32.mxu0 0.0
    %1208 = vmatmul.mubr.f32.gmra.mrb[0].mxu0 %v170
    %v1209 = vpop.f32.mrb[0].mxu0
    %v1210 = vadd.f32 %v1141, %v1209
    %v1211 = vpop.f32.mrb[0].mxu0
    %1212 = vdwg.mxu0
    %v1213 = vadd.f32 %v1129, %v1210
    %v1214 = vxor.u32 %v1213, 2147483648
    %v1215 = vmul.f32 %v1214, 1.442695
    %v1216 = vpow.pop %v1215
    %v1217 = vadd.f32 %v1216, 1.0
    %v1218 = vrcp.pop %v1217
    %v1219 = vmul.f32 1.0, %v1218
    %1221 = vrot.lane.b32.xlu0 %v1210, 64
    %v1222 = vpop.permute.xlu0 %1221
    %v1224 = vmul.f32 %v1219, %v1222
    %1226 = vrot.lane.b32.xlu0 %v1224, 64
    %v1227 = vpop.permute.xlu0 %1226
    %v1229 = vadd.f32 %v1129, %v1227
    %v1230 = vtanh.pop %v1229
    %v1231 = vsub.f32 1.0, %v1219
    %1233 = vrot.lane.b32.xlu0 %v1230, 96
    %v1234 = vpop.permute.xlu0 %1233
    %v1236 = vmul.f32 %v1231, %v1234
    %v1237 = vmul.f32 %v1219, 0.0
    %v1238 = vadd.f32 %v1236, %v1237
    %1240 = vrot.lane.b32.xlu0 %v1238, 96
    %v1241 = vpop.permute.xlu0 %1240
    %v1242 = vsel %vm168, %v1241, 0
    %1244 = vmatprep.subr.mxu0 0.0
    %1245 = vmatpush1.msra.mxu0 %v1044
    %1246 = vmatprep.subr.mxu0 0.0
    %1247 = vmatpush1.msra.mxu0 %v1045
    %1248 = vmatprep.subr.mxu0 0.0
    %1249 = vmatpush1.msra.mxu0 %v1046
    %1250 = vmatprep.subr.mxu0 0.0
    %1251 = vmatpush1.msra.mxu0 %v1047
    %1252 = vmatprep.subr.mxu0 0.0
    %1253 = vmatpush1.msra.mxu0 0.0
    %1254 = vmatprep.subr.mxu0 0.0
    %1255 = vmatpush1.msra.mxu0 0.0
    %1256 = vmatprep.subr.mxu0 0.0
    %1257 = vmatpush1.msra.mxu0 0.0
    %1258 = vmatprep.subr.mxu0 0.0
    %1259 = vmatpush1.msra.mxu0 0.0
    %1260 = vmatprep.subr.mxu0 0.0
    %1261 = vmatpush1.msra.mxu0 0.0
    %1262 = vmatprep.subr.mxu0 0.0
    %1263 = vmatpush1.msra.mxu0 0.0
    %1264 = vmatprep.subr.mxu0 0.0
    %1265 = vmatpush1.msra.mxu0 0.0
    %1266 = vmatprep.subr.mxu0 0.0
    %1267 = vmatpush1.msra.mxu0 0.0
    %1268 = vmatprep.subr.mxu0 0.0
    %1269 = vmatpush1.msra.mxu0 0.0
    %1270 = vmatprep.subr.mxu0 0.0
    %1271 = vmatpush1.msra.mxu0 0.0
    %1272 = vmatprep.subr.mxu0 0.0
    %1273 = vmatpush1.msra.mxu0 0.0
    %1274 = vmatprep.subr.mxu0 0.0
    %1275 = vmatpush1.msra.mxu0 0.0
    %1276 = vmatprep.subr.mxu0 0.0
    %1277 = vmatpush1.msra.mxu0 0.0
    %1278 = vmatprep.subr.mxu0 0.0
    %1279 = vmatpush1.msra.mxu0 0.0
    %1280 = vmatprep.subr.mxu0 0.0
    %1281 = vmatpush1.msra.mxu0 0.0
    %1282 = vmatprep.subr.mxu0 0.0
    %1283 = vmatpush1.msra.mxu0 0.0
    %1284 = vmatprep.subr.mxu0 0.0
    %1285 = vmatpush1.msra.mxu0 0.0
    %1286 = vmatprep.subr.mxu0 0.0
    %1287 = vmatpush1.msra.mxu0 0.0
    %1288 = vmatprep.subr.mxu0 0.0
    %1289 = vmatpush1.msra.mxu0 0.0
    %1290 = vmatprep.subr.mxu0 0.0
    %1291 = vmatpush1.msra.mxu0 0.0
    %1292 = vmatprep.subr.mxu0 0.0
    %1293 = vmatpush1.msra.mxu0 0.0
    %1294 = vmatprep.subr.mxu0 0.0
    %1295 = vmatpush1.msra.mxu0 0.0
    %1296 = vmatprep.subr.mxu0 0.0
    %1297 = vmatpush1.msra.mxu0 0.0
    %1298 = vmatprep.subr.mxu0 0.0
    %1299 = vmatpush1.msra.mxu0 0.0
    %1300 = vmatprep.subr.mxu0 0.0
    %1301 = vmatpush1.msra.mxu0 0.0
    %1302 = vmatprep.subr.mxu0 0.0
    %1303 = vmatpush1.msra.mxu0 0.0
    %1304 = vmatprep.subr.mxu0 0.0
    %1305 = vmatpush1.msra.mxu0 0.0
    %1306 = vmatprep.subr.mxu0 0.0
    %1307 = vmatpush1.msra.mxu0 0.0
    %1308 = vmatprep.mubr.f32.mxu0 0.0
    %1309 = vmatmul.mubr.f32.gmra.mrb[0].mxu0 %v1242
    %v1310 = vpop.f32.mrb[0].mxu0
    %v1311 = vadd.f32 %v1141, %v1310
    %v1312 = vpop.f32.mrb[0].mxu0
    %1313 = vdwg.mxu0
    %v1315 = vrot.slane %v1311, 6
    %v1317 = vadd.f32 %v1129, %v1315
    %v1318 = vxor.u32 %v1317, 2147483648
    %v1319 = vmul.f32 %v1318, 1.442695
    %v1320 = vpow.pop %v1319
    %v1321 = vadd.f32 %v1320, 1.0
    %v1322 = vrcp.pop %v1321
    %v1323 = vmul.f32 1.0, %v1322
    %1324 = vrot.lane.b32.xlu0 %v1315, 64
    %v1325 = vpop.permute.xlu0 %1324
    %v1327 = vmul.f32 %v1323, %v1325
    %1329 = vrot.lane.b32.xlu0 %v1327, 64
    %v1330 = vpop.permute.xlu0 %1329
    %v1332 = vadd.f32 %v1129, %v1330
    %v1333 = vtanh.pop %v1332
    %v1334 = vsub.f32 1.0, %v1323
    %1336 = vrot.lane.b32.xlu0 %v1333, 96
    %v1337 = vpop.permute.xlu0 %1336
    %v1339 = vmul.f32 %v1334, %v1337
    %v1340 = vrot.slane %v1238, 6
    %v1342 = vmul.f32 %v1323, %v1340
    %v1343 = vadd.f32 %v1339, %v1342
    %v1345 = vrot.slane %v1343, 2
    %1346 = vrot.lane.b32.xlu0 %v1345, 96
    %v1347 = vpop.permute.xlu0 %1346
    %v1348 = vsel %vm168, %v1347, 0
    %1350 = vmatprep.subr.mxu0 0.0
    %1351 = vmatpush1.msra.mxu0 %v1044
    %1352 = vmatprep.subr.mxu0 0.0
    %1353 = vmatpush1.msra.mxu0 %v1045
    %1354 = vmatprep.subr.mxu0 0.0
    %1355 = vmatpush1.msra.mxu0 %v1046
    %1356 = vmatprep.subr.mxu0 0.0
    %1357 = vmatpush1.msra.mxu0 %v1047
    %1358 = vmatprep.subr.mxu0 0.0
    %1359 = vmatpush1.msra.mxu0 0.0
    %1360 = vmatprep.subr.mxu0 0.0
    %1361 = vmatpush1.msra.mxu0 0.0
    %1362 = vmatprep.subr.mxu0 0.0
    %1363 = vmatpush1.msra.mxu0 0.0
    %1364 = vmatprep.subr.mxu0 0.0
    %1365 = vmatpush1.msra.mxu0 0.0
    %1366 = vmatprep.subr.mxu0 0.0
    %1367 = vmatpush1.msra.mxu0 0.0
    %1368 = vmatprep.subr.mxu0 0.0
    %1369 = vmatpush1.msra.mxu0 0.0
    %1370 = vmatprep.subr.mxu0 0.0
    %1371 = vmatpush1.msra.mxu0 0.0
    %1372 = vmatprep.subr.mxu0 0.0
    %1373 = vmatpush1.msra.mxu0 0.0
    %1374 = vmatprep.subr.mxu0 0.0
    %1375 = vmatpush1.msra.mxu0 0.0
    %1376 = vmatprep.subr.mxu0 0.0
    %1377 = vmatpush1.msra.mxu0 0.0
    %1378 = vmatprep.subr.mxu0 0.0
    %1379 = vmatpush1.msra.mxu0 0.0
    %1380 = vmatprep.subr.mxu0 0.0
    %1381 = vmatpush1.msra.mxu0 0.0
    %1382 = vmatprep.subr.mxu0 0.0
    %1383 = vmatpush1.msra.mxu0 0.0
    %1384 = vmatprep.subr.mxu0 0.0
    %1385 = vmatpush1.msra.mxu0 0.0
    %1386 = vmatprep.subr.mxu0 0.0
    %1387 = vmatpush1.msra.mxu0 0.0
    %1388 = vmatprep.subr.mxu0 0.0
    %1389 = vmatpush1.msra.mxu0 0.0
    %1390 = vmatprep.subr.mxu0 0.0
    %1391 = vmatpush1.msra.mxu0 0.0
    %1392 = vmatprep.subr.mxu0 0.0
    %1393 = vmatpush1.msra.mxu0 0.0
    %1394 = vmatprep.subr.mxu0 0.0
    %1395 = vmatpush1.msra.mxu0 0.0
    %1396 = vmatprep.subr.mxu0 0.0
    %1397 = vmatpush1.msra.mxu0 0.0
    %1398 = vmatprep.subr.mxu0 0.0
    %1399 = vmatpush1.msra.mxu0 0.0
    %1400 = vmatprep.subr.mxu0 0.0
    %1401 = vmatpush1.msra.mxu0 0.0
    %1402 = vmatprep.subr.mxu0 0.0
    %1403 = vmatpush1.msra.mxu0 0.0
    %1404 = vmatprep.subr.mxu0 0.0
    %1405 = vmatpush1.msra.mxu0 0.0
    %1406 = vmatprep.subr.mxu0 0.0
    %1407 = vmatpush1.msra.mxu0 0.0
    %1408 = vmatprep.subr.mxu0 0.0
    %1409 = vmatpush1.msra.mxu0 0.0
    %1410 = vmatprep.subr.mxu0 0.0
    %1411 = vmatpush1.msra.mxu0 0.0
    %1412 = vmatprep.subr.mxu0 0.0
    %1413 = vmatpush1.msra.mxu0 0.0
    %1414 = vmatprep.mubr.f32.mxu0 0.0
    %1415 = vmatmul.mubr.f32.gmra.mrb[0].mxu0 %v1348
    %v1416 = vpop.f32.mrb[0].mxu0
    %v1417 = vadd.f32 %v1141, %v1416
    %v1418 = vpop.f32.mrb[0].mxu0
    %1419 = vdwg.mxu0
    %v1421 = vrot.slane %v1417, 4
    %v1423 = vadd.f32 %v1129, %v1421
    %v1424 = vxor.u32 %v1423, 2147483648
    %v1425 = vmul.f32 %v1424, 1.442695
    %v1426 = vpow.pop %v1425
    %v1427 = vadd.f32 %v1426, 1.0
    %v1428 = vrcp.pop %v1427
    %v1429 = vmul.f32 1.0, %v1428
    %1430 = vrot.lane.b32.xlu0 %v1421, 64
    %v1431 = vpop.permute.xlu0 %1430
    %v1433 = vmul.f32 %v1429, %v1431
    %1435 = vrot.lane.b32.xlu0 %v1433, 64
    %v1436 = vpop.permute.xlu0 %1435
    %v1438 = vadd.f32 %v1129, %v1436
    %v1439 = vtanh.pop %v1438
    %v1440 = vsub.f32 1.0, %v1429
    %1442 = vrot.lane.b32.xlu0 %v1439, 96
    %v1443 = vpop.permute.xlu0 %1442
    %v1445 = vmul.f32 %v1440, %v1443
    %v1446 = vrot.slane %v1343, 6
    %v1448 = vmul.f32 %v1429, %v1446
    %v1449 = vadd.f32 %v1445, %v1448
    %v1451 = vrot.slane %v1449, 4
    %1452 = vrot.lane.b32.xlu0 %v1451, 96
    %v1453 = vpop.permute.xlu0 %1452
    %v1454 = vsel %vm168, %v1453, 0
    %1456 = vmatprep.subr.mxu0 0.0
    %1457 = vmatpush1.msra.mxu0 %v1044
    %1458 = vmatprep.subr.mxu0 0.0
    %1459 = vmatpush1.msra.mxu0 %v1045
    %1460 = vmatprep.subr.mxu0 0.0
    %1461 = vmatpush1.msra.mxu0 %v1046
    %1462 = vmatprep.subr.mxu0 0.0
    %1463 = vmatpush1.msra.mxu0 %v1047
    %1464 = vmatprep.subr.mxu0 0.0
    %1465 = vmatpush1.msra.mxu0 0.0
    %1466 = vmatprep.subr.mxu0 0.0
    %1467 = vmatpush1.msra.mxu0 0.0
    %1468 = vmatprep.subr.mxu0 0.0
    %1469 = vmatpush1.msra.mxu0 0.0
    %1470 = vmatprep.subr.mxu0 0.0
    %1471 = vmatpush1.msra.mxu0 0.0
    %1472 = vmatprep.subr.mxu0 0.0
    %1473 = vmatpush1.msra.mxu0 0.0
    %1474 = vmatprep.subr.mxu0 0.0
    %1475 = vmatpush1.msra.mxu0 0.0
    %1476 = vmatprep.subr.mxu0 0.0
    %1477 = vmatpush1.msra.mxu0 0.0
    %1478 = vmatprep.subr.mxu0 0.0
    %1479 = vmatpush1.msra.mxu0 0.0
    %1480 = vmatprep.subr.mxu0 0.0
    %1481 = vmatpush1.msra.mxu0 0.0
    %1482 = vmatprep.subr.mxu0 0.0
    %1483 = vmatpush1.msra.mxu0 0.0
    %1484 = vmatprep.subr.mxu0 0.0
    %1485 = vmatpush1.msra.mxu0 0.0
    %1486 = vmatprep.subr.mxu0 0.0
    %1487 = vmatpush1.msra.mxu0 0.0
    %1488 = vmatprep.subr.mxu0 0.0
    %1489 = vmatpush1.msra.mxu0 0.0
    %1490 = vmatprep.subr.mxu0 0.0
    %1491 = vmatpush1.msra.mxu0 0.0
    %1492 = vmatprep.subr.mxu0 0.0
    %1493 = vmatpush1.msra.mxu0 0.0
    %1494 = vmatprep.subr.mxu0 0.0
    %1495 = vmatpush1.msra.mxu0 0.0
    %1496 = vmatprep.subr.mxu0 0.0
    %1497 = vmatpush1.msra.mxu0 0.0
    %1498 = vmatprep.subr.mxu0 0.0
    %1499 = vmatpush1.msra.mxu0 0.0
    %1500 = vmatprep.subr.mxu0 0.0
    %1501 = vmatpush1.msra.mxu0 0.0
    %1502 = vmatprep.subr.mxu0 0.0
    %1503 = vmatpush1.msra.mxu0 0.0
    %1504 = vmatprep.subr.mxu0 0.0
    %1505 = vmatpush1.msra.mxu0 0.0
    %1506 = vmatprep.subr.mxu0 0.0
    %1507 = vmatpush1.msra.mxu0 0.0
    %1508 = vmatprep.subr.mxu0 0.0
    %1509 = vmatpush1.msra.mxu0 0.0
    %1510 = vmatprep.subr.mxu0 0.0
    %1511 = vmatpush1.msra.mxu0 0.0
    %1512 = vmatprep.subr.mxu0 0.0
    %1513 = vmatpush1.msra.mxu0 0.0
    %1514 = vmatprep.subr.mxu0 0.0
    %1515 = vmatpush1.msra.mxu0 0.0
    %1516 = vmatprep.subr.mxu0 0.0
    %1517 = vmatpush1.msra.mxu0 0.0
    %1518 = vmatprep.subr.mxu0 0.0
    %1519 = vmatpush1.msra.mxu0 0.0
    %1520 = vmatprep.mubr.f32.mxu0 0.0
    %1521 = vmatmul.mubr.f32.gmra.mrb[0].mxu0 %v1454
    %v1522 = vpop.f32.mrb[0].mxu0
    %v1523 = vadd.f32 %v1141, %v1522
    %v1524 = vpop.f32.mrb[0].mxu0
    %1525 = vdwg.mxu0
    %v1527 = vrot.slane %v1523, 2
    %v1529 = vadd.f32 %v1129, %v1527
    %v1530 = vxor.u32 %v1529, 2147483648
    %v1531 = vmul.f32 %v1530, 1.442695
    %v1532 = vpow.pop %v1531
    %v1533 = vadd.f32 %v1532, 1.0
    %v1534 = vrcp.pop %v1533
    %v1535 = vmul.f32 1.0, %v1534
    %1536 = vrot.lane.b32.xlu0 %v1527, 64
    %v1537 = vpop.permute.xlu0 %1536
    %v1539 = vmul.f32 %v1535, %v1537
    %1541 = vrot.lane.b32.xlu0 %v1539, 64
    %v1542 = vpop.permute.xlu0 %1541
    %v1544 = vadd.f32 %v1129, %v1542
    %v1545 = vtanh.pop %v1544
    %v1546 = vsub.f32 1.0, %v1535
    %1548 = vrot.lane.b32.xlu0 %v1545, 96
    %v1549 = vpop.permute.xlu0 %1548
    %v1551 = vmul.f32 %v1546, %v1549
    %v1552 = vrot.slane %v1449, 6
    %v1554 = vmul.f32 %v1535, %v1552
    %v1555 = vadd.f32 %v1551, %v1554
    %v1557 = vrot.slane %v1555, 6
    %1558 = vrot.lane.b32.xlu0 %v1557, 96
    %v1559 = vpop.permute.xlu0 %1558
    %v1560 = vsel %vm168, %v1559, 0
    %1562 = vmatprep.subr.mxu0 0.0
    %1563 = vmatpush1.msra.mxu0 %v1044
    %1564 = vmatprep.subr.mxu0 0.0
    %1565 = vmatpush1.msra.mxu0 %v1045
    %1566 = vmatprep.subr.mxu0 0.0
    %1567 = vmatpush1.msra.mxu0 %v1046
    %1568 = vmatprep.subr.mxu0 0.0
    %1569 = vmatpush1.msra.mxu0 %v1047
    %1570 = vmatprep.subr.mxu0 0.0
    %1571 = vmatpush1.msra.mxu0 0.0
    %1572 = vmatprep.subr.mxu0 0.0
    %1573 = vmatpush1.msra.mxu0 0.0
    %1574 = vmatprep.subr.mxu0 0.0
    %1575 = vmatpush1.msra.mxu0 0.0
    %1576 = vmatprep.subr.mxu0 0.0
    %1577 = vmatpush1.msra.mxu0 0.0
    %1578 = vmatprep.subr.mxu0 0.0
    %1579 = vmatpush1.msra.mxu0 0.0
    %1580 = vmatprep.subr.mxu0 0.0
    %1581 = vmatpush1.msra.mxu0 0.0
    %1582 = vmatprep.subr.mxu0 0.0
    %1583 = vmatpush1.msra.mxu0 0.0
    %1584 = vmatprep.subr.mxu0 0.0
    %1585 = vmatpush1.msra.mxu0 0.0
    %1586 = vmatprep.subr.mxu0 0.0
    %1587 = vmatpush1.msra.mxu0 0.0
    %1588 = vmatprep.subr.mxu0 0.0
    %1589 = vmatpush1.msra.mxu0 0.0
    %1590 = vmatprep.subr.mxu0 0.0
    %1591 = vmatpush1.msra.mxu0 0.0
    %1592 = vmatprep.subr.mxu0 0.0
    %1593 = vmatpush1.msra.mxu0 0.0
    %1594 = vmatprep.subr.mxu0 0.0
    %1595 = vmatpush1.msra.mxu0 0.0
    %1596 = vmatprep.subr.mxu0 0.0
    %1597 = vmatpush1.msra.mxu0 0.0
    %1598 = vmatprep.subr.mxu0 0.0
    %1599 = vmatpush1.msra.mxu0 0.0
    %1600 = vmatprep.subr.mxu0 0.0
    %1601 = vmatpush1.msra.mxu0 0.0
    %1602 = vmatprep.subr.mxu0 0.0
    %1603 = vmatpush1.msra.mxu0 0.0
    %1604 = vmatprep.subr.mxu0 0.0
    %1605 = vmatpush1.msra.mxu0 0.0
    %1606 = vmatprep.subr.mxu0 0.0
    %1607 = vmatpush1.msra.mxu0 0.0
    %1608 = vmatprep.subr.mxu0 0.0
    %1609 = vmatpush1.msra.mxu0 0.0
    %1610 = vmatprep.subr.mxu0 0.0
    %1611 = vmatpush1.msra.mxu0 0.0
    %1612 = vmatprep.subr.mxu0 0.0
    %1613 = vmatpush1.msra.mxu0 0.0
    %1614 = vmatprep.subr.mxu0 0.0
    %1615 = vmatpush1.msra.mxu0 0.0
    %1616 = vmatprep.subr.mxu0 0.0
    %1617 = vmatpush1.msra.mxu0 0.0
    %1618 = vmatprep.subr.mxu0 0.0
    %1619 = vmatpush1.msra.mxu0 0.0
    %1620 = vmatprep.subr.mxu0 0.0
    %1621 = vmatpush1.msra.mxu0 0.0
    %1622 = vmatprep.subr.mxu0 0.0
    %1623 = vmatpush1.msra.mxu0 0.0
    %1624 = vmatprep.subr.mxu0 0.0
    %1625 = vmatpush1.msra.mxu0 0.0
    %1626 = vmatprep.mubr.f32.mxu0 0.0
    %1627 = vmatmul.mubr.f32.gmra.mrb[0].mxu0 %v1560
    %v1628 = vpop.f32.mrb[0].mxu0
    %v1629 = vadd.f32 %v1141, %v1628
    %v1630 = vpop.f32.mrb[0].mxu0
    %1631 = vdwg.mxu0
    %v1632 = vadd.f32 %v1134, %v1629
    %v1633 = vxor.u32 %v1632, 2147483648
    %v1634 = vmul.f32 %v1633, 1.442695
    %v1635 = vpow.pop %v1634
    %v1636 = vadd.f32 %v1635, 1.0
    %v1637 = vrcp.pop %v1636
    %v1638 = vmul.f32 1.0, %v1637
    %1640 = vrot.lane.b32.xlu0 %v1629, 64
    %v1641 = vpop.permute.xlu0 %1640
    %v1643 = vmul.f32 %v1638, %v1641
    %1645 = vrot.lane.b32.xlu0 %v1643, 64
    %v1646 = vpop.permute.xlu0 %1645
    %v1648 = vadd.f32 %v1134, %v1646
    %v1649 = vtanh.pop %v1648
    %v1650 = vsub.f32 1.0, %v1638
    %1652 = vrot.lane.b32.xlu0 %v1649, 96
    %v1653 = vpop.permute.xlu0 %1652
    %v1655 = vmul.f32 %v1650, %v1653
    %v1657 = vmul.f32 %v1638, %v1557
    %v1658 = vadd.f32 %v1655, %v1657
    %1660 = vrot.lane.b32.xlu0 %v1658, 96
    %v1661 = vpop.permute.xlu0 %1660
    %v1662 = vsel %vm168, %v1661, 0
    %1664 = vmatprep.subr.mxu0 0.0
    %1665 = vmatpush1.msra.mxu0 %v1044
    %1666 = vmatprep.subr.mxu0 0.0
    %1667 = vmatpush1.msra.mxu0 %v1045
    %1668 = vmatprep.subr.mxu0 0.0
    %1669 = vmatpush1.msra.mxu0 %v1046
    %1670 = vmatprep.subr.mxu0 0.0
    %1671 = vmatpush1.msra.mxu0 %v1047
    %1672 = vmatprep.subr.mxu0 0.0
    %1673 = vmatpush1.msra.mxu0 0.0
    %1674 = vmatprep.subr.mxu0 0.0
    %1675 = vmatpush1.msra.mxu0 0.0
    %1676 = vmatprep.subr.mxu0 0.0
    %1677 = vmatpush1.msra.mxu0 0.0
    %1678 = vmatprep.subr.mxu0 0.0
    %1679 = vmatpush1.msra.mxu0 0.0
    %1680 = vmatprep.subr.mxu0 0.0
    %1681 = vmatpush1.msra.mxu0 0.0
    %1682 = vmatprep.subr.mxu0 0.0
    %1683 = vmatpush1.msra.mxu0 0.0
    %1684 = vmatprep.subr.mxu0 0.0
    %1685 = vmatpush1.msra.mxu0 0.0
    %1686 = vmatprep.subr.mxu0 0.0
    %1687 = vmatpush1.msra.mxu0 0.0
    %1688 = vmatprep.subr.mxu0 0.0
    %1689 = vmatpush1.msra.mxu0 0.0
    %1690 = vmatprep.subr.mxu0 0.0
    %1691 = vmatpush1.msra.mxu0 0.0
    %1692 = vmatprep.subr.mxu0 0.0
    %1693 = vmatpush1.msra.mxu0 0.0
    %1694 = vmatprep.subr.mxu0 0.0
    %1695 = vmatpush1.msra.mxu0 0.0
    %1696 = vmatprep.subr.mxu0 0.0
    %1697 = vmatpush1.msra.mxu0 0.0
    %1698 = vmatprep.subr.mxu0 0.0
    %1699 = vmatpush1.msra.mxu0 0.0
    %1700 = vmatprep.subr.mxu0 0.0
    %1701 = vmatpush1.msra.mxu0 0.0
    %1702 = vmatprep.subr.mxu0 0.0
    %1703 = vmatpush1.msra.mxu0 0.0
    %1704 = vmatprep.subr.mxu0 0.0
    %1705 = vmatpush1.msra.mxu0 0.0
    %1706 = vmatprep.subr.mxu0 0.0
    %1707 = vmatpush1.msra.mxu0 0.0
    %1708 = vmatprep.subr.mxu0 0.0
    %1709 = vmatpush1.msra.mxu0 0.0
    %1710 = vmatprep.subr.mxu0 0.0
    %1711 = vmatpush1.msra.mxu0 0.0
    %1712 = vmatprep.subr.mxu0 0.0
    %1713 = vmatpush1.msra.mxu0 0.0
    %1714 = vmatprep.subr.mxu0 0.0
    %1715 = vmatpush1.msra.mxu0 0.0
    %1716 = vmatprep.subr.mxu0 0.0
    %1717 = vmatpush1.msra.mxu0 0.0
    %1718 = vmatprep.subr.mxu0 0.0
    %1719 = vmatpush1.msra.mxu0 0.0
    %1720 = vmatprep.subr.mxu0 0.0
    %1721 = vmatpush1.msra.mxu0 0.0
    %1722 = vmatprep.subr.mxu0 0.0
    %1723 = vmatpush1.msra.mxu0 0.0
    %1724 = vmatprep.subr.mxu0 0.0
    %1725 = vmatpush1.msra.mxu0 0.0
    %1726 = vmatprep.subr.mxu0 0.0
    %1727 = vmatpush1.msra.mxu0 0.0
    %1728 = vmatprep.mubr.f32.mxu0 0.0
    %1729 = vmatmul.mubr.f32.gmra.mrb[0].mxu0 %v1662
    %v1730 = vpop.f32.mrb[0].mxu0
    %v1731 = vadd.f32 %v1141, %v1730
    %v1732 = vpop.f32.mrb[0].mxu0
    %1733 = vdwg.mxu0
    %v1735 = vrot.slane %v1731, 6
    %v1737 = vadd.f32 %v1134, %v1735
    %v1738 = vxor.u32 %v1737, 2147483648
    %v1739 = vmul.f32 %v1738, 1.442695
    %v1740 = vpow.pop %v1739
    %v1741 = vadd.f32 %v1740, 1.0
    %v1742 = vrcp.pop %v1741
    %v1743 = vmul.f32 1.0, %v1742
    %1744 = vrot.lane.b32.xlu0 %v1735, 64
    %v1745 = vpop.permute.xlu0 %1744
    %v1747 = vmul.f32 %v1743, %v1745
    %1749 = vrot.lane.b32.xlu0 %v1747, 64
    %v1750 = vpop.permute.xlu0 %1749
    %v1752 = vadd.f32 %v1134, %v1750
    %v1753 = vtanh.pop %v1752
    %v1754 = vsub.f32 1.0, %v1743
    %1756 = vrot.lane.b32.xlu0 %v1753, 96
    %v1757 = vpop.permute.xlu0 %1756
    %v1759 = vmul.f32 %v1754, %v1757
    %v1760 = vrot.slane %v1658, 6
    %v1762 = vmul.f32 %v1743, %v1760
    %v1763 = vadd.f32 %v1759, %v1762
    %v1765 = vrot.slane %v1763, 2
    %1766 = vrot.lane.b32.xlu0 %v1765, 96
    %v1767 = vpop.permute.xlu0 %1766
    %v1768 = vsel %vm168, %v1767, 0
    %1770 = vmatprep.subr.mxu0 0.0
    %1771 = vmatpush1.msra.mxu0 %v1044
    %1772 = vmatprep.subr.mxu0 0.0
    %1773 = vmatpush1.msra.mxu0 %v1045
    %1774 = vmatprep.subr.mxu0 0.0
    %1775 = vmatpush1.msra.mxu0 %v1046
    %1776 = vmatprep.subr.mxu0 0.0
    %1777 = vmatpush1.msra.mxu0 %v1047
    %1778 = vmatprep.subr.mxu0 0.0
    %1779 = vmatpush1.msra.mxu0 0.0
    %1780 = vmatprep.subr.mxu0 0.0
    %1781 = vmatpush1.msra.mxu0 0.0
    %1782 = vmatprep.subr.mxu0 0.0
    %1783 = vmatpush1.msra.mxu0 0.0
    %1784 = vmatprep.subr.mxu0 0.0
    %1785 = vmatpush1.msra.mxu0 0.0
    %1786 = vmatprep.subr.mxu0 0.0
    %1787 = vmatpush1.msra.mxu0 0.0
    %1788 = vmatprep.subr.mxu0 0.0
    %1789 = vmatpush1.msra.mxu0 0.0
    %1790 = vmatprep.subr.mxu0 0.0
    %1791 = vmatpush1.msra.mxu0 0.0
    %1792 = vmatprep.subr.mxu0 0.0
    %1793 = vmatpush1.msra.mxu0 0.0
    %1794 = vmatprep.subr.mxu0 0.0
    %1795 = vmatpush1.msra.mxu0 0.0
    %1796 = vmatprep.subr.mxu0 0.0
    %1797 = vmatpush1.msra.mxu0 0.0
    %1798 = vmatprep.subr.mxu0 0.0
    %1799 = vmatpush1.msra.mxu0 0.0
    %1800 = vmatprep.subr.mxu0 0.0
    %1801 = vmatpush1.msra.mxu0 0.0
    %1802 = vmatprep.subr.mxu0 0.0
    %1803 = vmatpush1.msra.mxu0 0.0
    %1804 = vmatprep.subr.mxu0 0.0
    %1805 = vmatpush1.msra.mxu0 0.0
    %1806 = vmatprep.subr.mxu0 0.0
    %1807 = vmatpush1.msra.mxu0 0.0
    %1808 = vmatprep.subr.mxu0 0.0
    %1809 = vmatpush1.msra.mxu0 0.0
    %1810 = vmatprep.subr.mxu0 0.0
    %1811 = vmatpush1.msra.mxu0 0.0
    %1812 = vmatprep.subr.mxu0 0.0
    %1813 = vmatpush1.msra.mxu0 0.0
    %1814 = vmatprep.subr.mxu0 0.0
    %1815 = vmatpush1.msra.mxu0 0.0
    %1816 = vmatprep.subr.mxu0 0.0
    %1817 = vmatpush1.msra.mxu0 0.0
    %1818 = vmatprep.subr.mxu0 0.0
    %1819 = vmatpush1.msra.mxu0 0.0
    %1820 = vmatprep.subr.mxu0 0.0
    %1821 = vmatpush1.msra.mxu0 0.0
    %1822 = vmatprep.subr.mxu0 0.0
    %1823 = vmatpush1.msra.mxu0 0.0
    %1824 = vmatprep.subr.mxu0 0.0
    %1825 = vmatpush1.msra.mxu0 0.0
    %1826 = vmatprep.subr.mxu0 0.0
    %1827 = vmatpush1.msra.mxu0 0.0
    %1828 = vmatprep.subr.mxu0 0.0
    %1829 = vmatpush1.msra.mxu0 0.0
    %1830 = vmatprep.subr.mxu0 0.0
    %1831 = vmatpush1.msra.mxu0 0.0
    %1832 = vmatprep.subr.mxu0 0.0
    %1833 = vmatpush1.msra.mxu0 0.0
    %1834 = vmatprep.mubr.f32.mxu0 0.0
    %1835 = vmatmul.mubr.f32.gmra.mrb[0].mxu0 %v1768
    %v1836 = vpop.f32.mrb[0].mxu0
    %v1837 = vadd.f32 %v1141, %v1836
    %v1838 = vpop.f32.mrb[0].mxu0
    %1839 = vdwg.mxu0
    %v1841 = vrot.slane %v1837, 4
    %v1843 = vadd.f32 %v1134, %v1841
    %v1844 = vxor.u32 %v1843, 2147483648
    %v1845 = vmul.f32 %v1844, 1.442695
    %v1846 = vpow.pop %v1845
    %v1847 = vadd.f32 %v1846, 1.0
    %v1848 = vrcp.pop %v1847
    %v1849 = vmul.f32 1.0, %v1848
    %1850 = vrot.lane.b32.xlu0 %v1841, 64
    %v1851 = vpop.permute.xlu0 %1850
    %v1853 = vmul.f32 %v1849, %v1851
    %1855 = vrot.lane.b32.xlu0 %v1853, 64
    %v1856 = vpop.permute.xlu0 %1855
    %v1858 = vadd.f32 %v1134, %v1856
    %v1859 = vtanh.pop %v1858
    %v1860 = vsub.f32 1.0, %v1849
    %1862 = vrot.lane.b32.xlu0 %v1859, 96
    %v1863 = vpop.permute.xlu0 %1862
    %v1865 = vmul.f32 %v1860, %v1863
    %v1866 = vrot.slane %v1763, 6
    %v1868 = vmul.f32 %v1849, %v1866
    %v1869 = vadd.f32 %v1865, %v1868
    %v1871 = vrot.slane %v1869, 4
    %1872 = vrot.lane.b32.xlu0 %v1871, 96
    %v1873 = vpop.permute.xlu0 %1872
    %v1874 = vsel %vm168, %v1873, 0
    %1876 = vmatprep.subr.mxu0 0.0
    %1877 = vmatpush1.msra.mxu0 %v1044
    %1878 = vmatprep.subr.mxu0 0.0
    %1879 = vmatpush1.msra.mxu0 %v1045
    %1880 = vmatprep.subr.mxu0 0.0
    %1881 = vmatpush1.msra.mxu0 %v1046
    %1882 = vmatprep.subr.mxu0 0.0
    %1883 = vmatpush1.msra.mxu0 %v1047
    %1884 = vmatprep.subr.mxu0 0.0
    %1885 = vmatpush1.msra.mxu0 0.0
    %1886 = vmatprep.subr.mxu0 0.0
    %1887 = vmatpush1.msra.mxu0 0.0
    %1888 = vmatprep.subr.mxu0 0.0
    %1889 = vmatpush1.msra.mxu0 0.0
    %1890 = vmatprep.subr.mxu0 0.0
    %1891 = vmatpush1.msra.mxu0 0.0
    %1892 = vmatprep.subr.mxu0 0.0
    %1893 = vmatpush1.msra.mxu0 0.0
    %1894 = vmatprep.subr.mxu0 0.0
    %1895 = vmatpush1.msra.mxu0 0.0
    %1896 = vmatprep.subr.mxu0 0.0
    %1897 = vmatpush1.msra.mxu0 0.0
    %1898 = vmatprep.subr.mxu0 0.0
    %1899 = vmatpush1.msra.mxu0 0.0
    %1900 = vmatprep.subr.mxu0 0.0
    %1901 = vmatpush1.msra.mxu0 0.0
    %1902 = vmatprep.subr.mxu0 0.0
    %1903 = vmatpush1.msra.mxu0 0.0
    %1904 = vmatprep.subr.mxu0 0.0
    %1905 = vmatpush1.msra.mxu0 0.0
    %1906 = vmatprep.subr.mxu0 0.0
    %1907 = vmatpush1.msra.mxu0 0.0
    %1908 = vmatprep.subr.mxu0 0.0
    %1909 = vmatpush1.msra.mxu0 0.0
    %1910 = vmatprep.subr.mxu0 0.0
    %1911 = vmatpush1.msra.mxu0 0.0
    %1912 = vmatprep.subr.mxu0 0.0
    %1913 = vmatpush1.msra.mxu0 0.0
    %1914 = vmatprep.subr.mxu0 0.0
    %1915 = vmatpush1.msra.mxu0 0.0
    %1916 = vmatprep.subr.mxu0 0.0
    %1917 = vmatpush1.msra.mxu0 0.0
    %1918 = vmatprep.subr.mxu0 0.0
    %1919 = vmatpush1.msra.mxu0 0.0
    %1920 = vmatprep.subr.mxu0 0.0
    %1921 = vmatpush1.msra.mxu0 0.0
    %1922 = vmatprep.subr.mxu0 0.0
    %1923 = vmatpush1.msra.mxu0 0.0
    %1924 = vmatprep.subr.mxu0 0.0
    %1925 = vmatpush1.msra.mxu0 0.0
    %1926 = vmatprep.subr.mxu0 0.0
    %1927 = vmatpush1.msra.mxu0 0.0
    %1928 = vmatprep.subr.mxu0 0.0
    %1929 = vmatpush1.msra.mxu0 0.0
    %1930 = vmatprep.subr.mxu0 0.0
    %1931 = vmatpush1.msra.mxu0 0.0
    %1932 = vmatprep.subr.mxu0 0.0
    %1933 = vmatpush1.msra.mxu0 0.0
    %1934 = vmatprep.subr.mxu0 0.0
    %1935 = vmatpush1.msra.mxu0 0.0
    %1936 = vmatprep.subr.mxu0 0.0
    %1937 = vmatpush1.msra.mxu0 0.0
    %1938 = vmatprep.subr.mxu0 0.0
    %1939 = vmatpush1.msra.mxu0 0.0
    %1940 = vmatprep.mubr.f32.mxu0 0.0
    %1941 = vmatmul.mubr.f32.gmra.mrb[0].mxu0 %v1874
    %v1942 = vpop.f32.mrb[0].mxu0
    %v1943 = vadd.f32 %v1141, %v1942
    %v1944 = vpop.f32.mrb[0].mxu0
    %1945 = vdwg.mxu0
    %v1947 = vrot.slane %v1943, 2
    %v1949 = vadd.f32 %v1134, %v1947
    %v1950 = vxor.u32 %v1949, 2147483648
    %v1951 = vmul.f32 %v1950, 1.442695
    %v1952 = vpow.pop %v1951
    %v1953 = vadd.f32 %v1952, 1.0
    %v1954 = vrcp.pop %v1953
    %v1955 = vmul.f32 1.0, %v1954
    %1956 = vrot.lane.b32.xlu0 %v1947, 64
    %v1957 = vpop.permute.xlu0 %1956
    %v1959 = vmul.f32 %v1955, %v1957
    %1961 = vrot.lane.b32.xlu0 %v1959, 64
    %v1962 = vpop.permute.xlu0 %1961
    %v1964 = vadd.f32 %v1134, %v1962
    %v1965 = vtanh.pop %v1964
    %v1966 = vsub.f32 1.0, %v1955
    %1968 = vrot.lane.b32.xlu0 %v1965, 96
    %v1969 = vpop.permute.xlu0 %1968
    %v1971 = vmul.f32 %v1966, %v1969
    %v1972 = vrot.slane %v1869, 6
    %v1974 = vmul.f32 %v1955, %v1972
    %v1975 = vadd.f32 %v1971, %v1974
    %v1976 = vmax.f32 %v1975, 0.0
    %v1977 = vld [vmem:[%s9] sm:$0xff]
    %v1978 = vld [vmem:[%s9 + $0x8] sm:$0xff]
    %v1979 = vld [vmem:[%s9 + $0x10] sm:$0xff]
    %v1980 = vld [vmem:[%s9 + $0x18] sm:$0xff]
    %v1981 = vld [vmem:[%s10] sm:$0x1]
    %v1983 = vlaneseq
    %v1984 = vshrl.u32 %v1983, 7
    %v1985 = vsub.s32 0, %v1984
    %v1986 = vrot.slane %v1981, %v1985
    %v1989 = vrot.slane %v1976, 6
    %1990 = vrot.lane.b32.xlu0 %v1989, 96
    %v1991 = vpop.permute.xlu0 %1990
    %v1992 = vsel %vm168, %v1991, 0
    %1994 = vmatprep.subr.mxu0 0.0
    %1995 = vmatpush1.msra.mxu0 %v1977
    %1996 = vmatprep.subr.mxu0 0.0
    %1997 = vmatpush1.msra.mxu0 %v1978
    %1998 = vmatprep.subr.mxu0 0.0
    %1999 = vmatpush1.msra.mxu0 %v1979
    %2000 = vmatprep.subr.mxu0 0.0
    %2001 = vmatpush1.msra.mxu0 %v1980
    %2002 = vmatprep.subr.mxu0 0.0
    %2003 = vmatpush1.msra.mxu0 0.0
    %2004 = vmatprep.subr.mxu0 0.0
    %2005 = vmatpush1.msra.mxu0 0.0
    %2006 = vmatprep.subr.mxu0 0.0
    %2007 = vmatpush1.msra.mxu0 0.0
    %2008 = vmatprep.subr.mxu0 0.0
    %2009 = vmatpush1.msra.mxu0 0.0
    %2010 = vmatprep.subr.mxu0 0.0
    %2011 = vmatpush1.msra.mxu0 0.0
    %2012 = vmatprep.subr.mxu0 0.0
    %2013 = vmatpush1.msra.mxu0 0.0
    %2014 = vmatprep.subr.mxu0 0.0
    %2015 = vmatpush1.msra.mxu0 0.0
    %2016 = vmatprep.subr.mxu0 0.0
    %2017 = vmatpush1.msra.mxu0 0.0
    %2018 = vmatprep.subr.mxu0 0.0
    %2019 = vmatpush1.msra.mxu0 0.0
    %2020 = vmatprep.subr.mxu0 0.0
    %2021 = vmatpush1.msra.mxu0 0.0
    %2022 = vmatprep.subr.mxu0 0.0
    %2023 = vmatpush1.msra.mxu0 0.0
    %2024 = vmatprep.subr.mxu0 0.0
    %2025 = vmatpush1.msra.mxu0 0.0
    %2026 = vmatprep.subr.mxu0 0.0
    %2027 = vmatpush1.msra.mxu0 0.0
    %2028 = vmatprep.subr.mxu0 0.0
    %2029 = vmatpush1.msra.mxu0 0.0
    %2030 = vmatprep.subr.mxu0 0.0
    %2031 = vmatpush1.msra.mxu0 0.0
    %2032 = vmatprep.subr.mxu0 0.0
    %2033 = vmatpush1.msra.mxu0 0.0
    %2034 = vmatprep.subr.mxu0 0.0
    %2035 = vmatpush1.msra.mxu0 0.0
    %2036 = vmatprep.subr.mxu0 0.0
    %2037 = vmatpush1.msra.mxu0 0.0
    %2038 = vmatprep.subr.mxu0 0.0
    %2039 = vmatpush1.msra.mxu0 0.0
    %2040 = vmatprep.subr.mxu0 0.0
    %2041 = vmatpush1.msra.mxu0 0.0
    %2042 = vmatprep.subr.mxu0 0.0
    %2043 = vmatpush1.msra.mxu0 0.0
    %2044 = vmatprep.subr.mxu0 0.0
    %2045 = vmatpush1.msra.mxu0 0.0
    %2046 = vmatprep.subr.mxu0 0.0
    %2047 = vmatpush1.msra.mxu0 0.0
    %2048 = vmatprep.subr.mxu0 0.0
    %2049 = vmatpush1.msra.mxu0 0.0
    %2050 = vmatprep.subr.mxu0 0.0
    %2051 = vmatpush1.msra.mxu0 0.0
    %2052 = vmatprep.subr.mxu0 0.0
    %2053 = vmatpush1.msra.mxu0 0.0
    %2054 = vmatprep.subr.mxu0 0.0
    %2055 = vmatpush1.msra.mxu0 0.0
    %2056 = vmatprep.subr.mxu0 0.0
    %2057 = vmatpush1.msra.mxu0 0.0
    %2058 = vmatprep.mubr.f32.mxu0 0.0
    %2059 = vmatmul.mubr.f32.gmra.mrb[0].mxu0 %v1992
    %v2060 = vpop.f32.mrb[0].mxu0
    %v2061 = vadd.f32 %v1986, %v2060
    %v2062 = vpop.f32.mrb[0].mxu0
    %2063 = vdwg.mxu0
    %vm2064 = vcmask 123904
    %2065 = vst.msk [vmem:[#allocation8] sm:$0x3] %vm2064, %v2061
    // Predicated region
    $region54: #{tpu_custom_call.1} parent=1 // pred_check
      _
    $region55: #{tpu_custom_call.1} parent=1 // pred_check_branch
      %2067 = sbr.rel (0) target = $region57
    $region56: #{tpu_custom_call.1} parent=1 // pred_region
      %s2069 = ssub.s32 32, 32
      %2070 = vsyncadd [#allocation5], %s2069
      %s2072 = sshll.u32 [#allocation8], 4
      %s2073 = int_to_ptr.vmem [resolvable:$true] %s2072
      %2075 = dma.vmem_to_hbm [thread:$0]  %s2073, 32, %s11, [#allocation5]
    $region57: #{tpu_custom_call.1} parent=1 // pred_fallthru
      _
    // Predicated region
    $region58: #{tpu_custom_call.1} parent=1 // pred_check
      _
    $region59: #{tpu_custom_call.1} parent=1 // pred_check_branch
      %2077 = sbr.rel (0) target = $region61
    $region60: #{tpu_custom_call.1} parent=1 // pred_region
      %2078 = dma.done [#allocation5], 32
    $region61: #{tpu_custom_call.1} parent=1 // pred_fallthru
      _
    %2079 = vsyncpa [#allocation4], 1
    %2080 = vsyncpa [#allocation7], 1
    %2081 = vsyncpa [#allocation5], 1

</llo_original>
